<compile_context>
chip_gen: v7x
topology: tpu7x:2x2x1
jax: 0.10.0
libtpu: 0.0.40
codegen_flags: <defaults>
</compile_context>

<pallas_src>
import functools

import jax
import jax.numpy as jnp
from jax import lax
from jax.experimental import pallas as pl
from jax.experimental.pallas import tpu as pltpu


def _rvq_kernel(x_ref, en_ref, embT_ref, xq_ref, codes_ref, loss_ref,
                *, inv_tau, n_valid):
    """Per-tile kernel.

    x_ref:     (TM, D)       f32  natural-layout input rows
    en_ref:    (L, K, D)     f32  L2-normalized codebooks (VMEM resident)
    embT_ref:  (L, D, K)     f32  raw codebooks, transposed (VMEM resident)
    xq_ref:    (TM, D)       f32  natural-layout quantized output rows
    codes_ref: (L, TM)       i32  per-layer code index (lane-dense)
    loss_ref:  (1, 128)      f32  per-tile partial CE sum (broadcast scalar)
    """
    TM, D = x_ref.shape
    L, K, _ = en_ref.shape
    eps2 = jnp.float32(1e-24)          # (1e-12)^2 under rsqrt == F.normalize eps
    k_sent = jnp.int32(K)

    # ---- static chunk plan: 128-lane sub-chunks of the tile -----------------
    CH = 128 if TM >= 128 else TM
    offs = list(range(0, TM, CH))
    widths = [min(CH, TM - o) for o in offs]

    # ---- hoisted constants (iotas / identities), one per distinct width -----
    eye_d = (lax.broadcasted_iota(jnp.int32, (D, D), 0) ==
             lax.broadcasted_iota(jnp.int32, (D, D), 1)).astype(jnp.float32)
    consts = {}
    for w in set(widths):
        lane = lax.broadcasted_iota(jnp.int32, (1, w), 1)
        row_k = lax.broadcasted_iota(jnp.int32, (K, w), 0)
        eye_w = (lax.broadcasted_iota(jnp.int32, (w, w), 0) ==
                 lax.broadcasted_iota(jnp.int32, (w, w), 1)).astype(jnp.float32)
        consts[w] = (lane, row_k, eye_w)

    nt = (((1,), (1,)), ((), ()))      # contract-last-last (A @ B^T) dim numbers
    base = pl.program_id(0) * TM
    loss_total = jnp.float32(0.0)

    for off, w in zip(offs, widths):
        lane, row_k, eye_w = consts[w]
        x_nat = x_ref[pl.ds(off, w), :]                        # (w, D)
        # transpose to (D, w) (N on the lane axis) via identity matmul on MXU
        res = lax.dot_general(eye_d, x_nat, nt,
                              preferred_element_type=jnp.float32)      # (D, w)
        acc = None
        lse_cols = jnp.zeros((1, w), jnp.float32)

        for l in range(L):                                     # L small & static
            en = en_ref[l]                                     # (K, D) unit rows
            embT = embT_ref[l]                                 # (D, K) raw

            # deferred normalization: cos = (en @ res) * rsqrt(||res||^2)
            ss = jnp.sum(res * res, axis=0, keepdims=True)     # (1, w)
            scale = lax.rsqrt(jnp.maximum(ss, eps2)) * inv_tau
            cos_raw = jnp.dot(en, res,
                              preferred_element_type=jnp.float32)      # (K, w)
            max_raw = jnp.max(cos_raw, axis=0, keepdims=True)  # (1, w)

            # CE identity: per-sample loss = log(sum(exp((cos - max_cos)/tau)))
            p = jnp.exp((cos_raw - max_raw) * scale)
            lse_cols = lse_cols + jnp.log(jnp.sum(p, axis=0, keepdims=True))

            # argmin(d) == argmax(cos_raw); first occurrence (torch tie-break)
            idx = jnp.min(jnp.where(cos_raw == max_raw, row_k, k_sent),
                          axis=0, keepdims=True)               # (1, w) i32
            idx = jnp.minimum(idx, k_sent - 1)                 # all-NaN guard

            # gather as one-hot matmul (lane-dense, MXU)
            onehot = (row_k == idx).astype(jnp.float32)        # (K, w)
            x_res = jnp.dot(embT, onehot,
                            preferred_element_type=jnp.float32)        # (D, w)
            res = res - x_res
            acc = x_res if acc is None else acc + x_res
            codes_ref[pl.ds(l, 1), pl.ds(off, w)] = idx        # lane-dense row

        # transpose (D, w) -> (w, D) on the MXU and store natural-layout x_q
        xq_ref[pl.ds(off, w), :] = lax.dot_general(
            eye_w, acc, nt, preferred_element_type=jnp.float32)
        # partial cross-entropy SUM over valid rows; the mean is in the wrapper
        valid = (base + off + lane) < n_valid
        loss_total = loss_total + jnp.sum(jnp.where(valid, lse_cols, 0.0))

    loss_ref[...] = jnp.full((1, 128), loss_total, dtype=jnp.float32)


def residual_vector_quantizer(x, codebooks, *, tau=0.2, tile_m=2048):
    """x: (..., D) f32; codebooks: (L, K, D) f32.

    Returns (x_q, mean_loss, codes) matching the PyTorch eval-mode forward
    (dist='cos', vq_ema=False)."""
    D = x.shape[-1]
    L, K, Dc = codebooks.shape
    assert Dc == D

    x2d = x.reshape(-1, D).astype(jnp.float32)
    N = x2d.shape[0]

    # Row-tile selection (no padding, no host-side transposes):
    #  * N <= 256           -> one exact tile (blocks equal full dims: legal)
    #  * 256 < N <= 2*cap   -> ~two 128-aligned tiles (megacore split on v7x)
    #  * otherwise          -> cap-sized tiles, ragged last block handled by
    #                          Pallas + in-kernel validity masking
    tm_cap = max(256, (int(tile_m) // 256) * 256)
    if N <= 256:
        TM = N
    elif N <= 2 * tm_cap:
        TM = ((pl.cdiv(N, 2) + 127) // 128) * 128
    else:
        TM = tm_cap
    n_tiles = pl.cdiv(N, TM)

    cb = codebooks.astype(jnp.float32)
    # codebook normalization is residual-independent: hoist it out of the kernel
    en = cb / jnp.maximum(
        jnp.sqrt(jnp.sum(cb * cb, axis=-1, keepdims=True)), 1e-12)    # (L, K, D)
    embT = jnp.swapaxes(cb, -1, -2)                                    # (L, D, K)

    kernel = functools.partial(_rvq_kernel, inv_tau=1.0 / float(tau), n_valid=N)

    xq, codes, loss_parts = pl.pallas_call(
        kernel,
        out_shape=(
            jax.ShapeDtypeStruct((N, D), jnp.float32),
            jax.ShapeDtypeStruct((L, N), jnp.int32),
            jax.ShapeDtypeStruct((n_tiles, 128), jnp.float32),
        ),
        grid_spec=pltpu.PrefetchScalarGridSpec(
            num_scalar_prefetch=0,
            grid=(n_tiles,),
            in_specs=[
                pl.BlockSpec((TM, D), lambda i: (i, 0)),
                pl.BlockSpec((L, K, D), lambda i: (0, 0, 0)),   # resident codebooks
                pl.BlockSpec((L, D, K), lambda i: (0, 0, 0)),   # resident codebooks^T
            ],
            out_specs=(
                pl.BlockSpec((TM, D), lambda i: (i, 0)),
                pl.BlockSpec((L, TM), lambda i: (0, i)),
                pl.BlockSpec((1, 128), lambda i: (i, 0)),
            ),
        ),
        compiler_params=pltpu.CompilerParams(
            dimension_semantics=("parallel",),
        ),
    )(x2d, en, embT)

    x_q = xq.reshape(x.shape)
    # (L, N) -> (..., L): tiny int transpose (L/D of one x pass), kept on host XLA
    codes_out = jnp.swapaxes(codes, 0, 1).reshape(x.shape[:-1] + (L,))
    loss = jnp.sum(loss_parts[:, 0]) / jnp.float32(N * L)
    return x_q, loss, codes_out


def _reference(x, codebooks, tau=0.2):
    """Plain-JAX reference of the same math (for a correctness check)."""
    D = x.shape[-1]
    L = codebooks.shape[0]
    lat = x.reshape(-1, D)
    res = lat
    acc = jnp.zeros_like(lat)
    codes, losses = [], []
    for l in range(L):
        emb = codebooks[l]
        rn = res / jnp.maximum(jnp.linalg.norm(res, axis=-1, keepdims=True), 1e-12)
        en = emb / jnp.maximum(jnp.linalg.norm(emb, axis=-1, keepdims=True), 1e-12)
        cos = rn @ en.T
        logits = cos / tau
        idx = jnp.argmax(cos, axis=-1)
        lse = jax.scipy.special.logsumexp(logits, axis=-1)
        losses.append(jnp.mean(lse - jnp.take_along_axis(logits, idx[:, None], 1)[:, 0]))
        x_res = emb[idx]
        res = res - x_res
        acc = acc + x_res
        codes.append(idx.astype(jnp.int32))
    return (acc.reshape(x.shape),
            jnp.mean(jnp.stack(losses)),
            jnp.stack(codes, -1).reshape(x.shape[:-1] + (L,)))


if __name__ == "__main__":
    # ResidualVectorQuantizer(codebook_num=3, codebook_size=16, codebook_dim=32)
    codebook_num, codebook_size, codebook_dim = 3, 16, 32
    key = jax.random.PRNGKey(0)
    kx, kc = jax.random.split(key)

    # input: batch=2, seq=64, hidden=codebook_dim  (N = 128 rows)
    x = jax.random.normal(kx, (2, 64, codebook_dim), dtype=jnp.float32)
    # deterministic synthetic codebooks (PyTorch zero-init would be degenerate
    # under cosine normalization; this is a synthetic kernel, not a checkpoint)
    codebooks = jax.random.normal(
        kc, (codebook_num, codebook_size, codebook_dim), dtype=jnp.float32)

    x_q, loss, codes = residual_vector_quantizer(x, codebooks, tau=0.2)
    jax.block_until_ready((x_q, loss, codes))

    xr, lr, cr = _reference(x, codebooks, tau=0.2)
    assert x_q.shape == x.shape
    assert codes.shape == x.shape[:-1] + (codebook_num,)
    assert jnp.allclose(x_q, xr, atol=1e-4, rtol=1e-4)
    assert jnp.allclose(loss, lr, atol=1e-4, rtol=1e-4)
    assert jnp.array_equal(codes, cr)

    print("KERNEL_OK")
</pallas_src>

<mosaic_0001>
module attributes {stable_mosaic.version = 11 : i64} {
  func.func @_rvq_kernel(%arg0: i32, %arg1: memref<128x32xf32, #tpu.memory_space<vmem>>, %arg2: memref<3x16x32xf32, #tpu.memory_space<vmem>>, %arg3: memref<3x32x16xf32, #tpu.memory_space<vmem>>, %arg4: memref<128x32xf32, #tpu.memory_space<vmem>>, %arg5: memref<3x128xi32, #tpu.memory_space<vmem>>, %arg6: memref<1x128xf32, #tpu.memory_space<vmem>>) attributes {dimension_semantics = [#tpu.dimension_semantics<parallel>], iteration_bounds = array<i64: 1>, scalar_prefetch = 0 : i64, scratch_operands = 0 : i64, tpu.core_type = #tpu.core_type<tc>, window_params = [{transform_indices = @transform_0, window_bounds = array<i64: 128, 32>}, {pipeline_mode = #tpu.pipeline_mode<synchronous>, transform_indices = @transform_1, window_bounds = array<i64: 3, 16, 32>}, {pipeline_mode = #tpu.pipeline_mode<synchronous>, transform_indices = @transform_2, window_bounds = array<i64: 3, 32, 16>}, {transform_indices = @transform_3, window_bounds = array<i64: 128, 32>}, {transform_indices = @transform_4, window_bounds = array<i64: 3, 128>}, {transform_indices = @transform_5, window_bounds = array<i64: 1, 128>}]} {
    %0 = tpu.iota {dimensions = array<i32: 0>} : vector<32x32xi32>
    %1 = tpu.iota {dimensions = array<i32: 1>} : vector<32x32xi32>
    %2 = arith.cmpi eq, %0, %1 : vector<32x32xi32>
    %3 = arith.extui %2 : vector<32x32xi1> to vector<32x32xi32>
    %4 = arith.sitofp %3 : vector<32x32xi32> to vector<32x32xf32>
    %5 = tpu.iota {dimensions = array<i32: 1>} : vector<1x128xi32>
    %6 = tpu.iota {dimensions = array<i32: 0>} : vector<16x128xi32>
    %7 = tpu.iota {dimensions = array<i32: 0>} : vector<128x128xi32>
    %8 = tpu.iota {dimensions = array<i32: 1>} : vector<128x128xi32>
    %9 = arith.cmpi eq, %7, %8 : vector<128x128xi32>
    %10 = arith.extui %9 : vector<128x128xi1> to vector<128x128xi32>
    %11 = arith.sitofp %10 : vector<128x128xi32> to vector<128x128xf32>
    %c128_i32 = arith.constant 128 : i32
    %12 = arith.muli %arg0, %c128_i32 : i32
    %c0 = arith.constant 0 : index
    %c0_0 = arith.constant 0 : index
    %13 = vector.load %arg1[%c0, %c0_0] : memref<128x32xf32, #tpu.memory_space<vmem>>, vector<128x32xf32>
    %cst = arith.constant dense<0.000000e+00> : vector<32x128xf32>
    %14 = tpu.matmul %4, %13, %cst {dimension_numbers = #tpu.dot_dimension_numbers<[1], [1], [0], [0], [0, 0, 1, 0], [], []>} : vector<32x32xf32>, vector<128x32xf32>, vector<32x128xf32> -> vector<32x128xf32>
    %cst_1 = arith.constant 0.000000e+00 : f32
    %15 = vector.broadcast %cst_1 : f32 to vector<1x128xf32>
    %c0_2 = arith.constant 0 : index
    %c0_3 = arith.constant 0 : index
    %c0_4 = arith.constant 0 : index
    %16 = vector.load %arg2[%c0_2, %c0_3, %c0_4] : memref<3x16x32xf32, #tpu.memory_space<vmem>>, vector<1x16x32xf32>
    %17 = vector.shape_cast %16 : vector<1x16x32xf32> to vector<16x32xf32>
    %c0_5 = arith.constant 0 : index
    %c0_6 = arith.constant 0 : index
    %c0_7 = arith.constant 0 : index
    %18 = vector.load %arg3[%c0_5, %c0_6, %c0_7] : memref<3x32x16xf32, #tpu.memory_space<vmem>>, vector<1x32x16xf32>
    %19 = vector.shape_cast %18 : vector<1x32x16xf32> to vector<32x16xf32>
    %20 = arith.mulf %14, %14 : vector<32x128xf32>
    %cst_8 = arith.constant dense<0.000000e+00> : vector<128xf32>
    %21 = vector.multi_reduction <add>, %20, %cst_8 [0] : vector<32x128xf32> to vector<128xf32>
    %22 = vector.shape_cast %21 : vector<128xf32> to vector<1x128xf32>
    %cst_9 = arith.constant 1.000000e-24 : f32
    %23 = vector.broadcast %cst_9 : f32 to vector<1x128xf32>
    %24 = arith.maximumf %22, %23 : vector<1x128xf32>
    %25 = math.rsqrt %24 : vector<1x128xf32>
    %cst_10 = arith.constant 5.000000e+00 : f32
    %26 = vector.broadcast %cst_10 : f32 to vector<1x128xf32>
    %27 = arith.mulf %25, %26 : vector<1x128xf32>
    %cst_11 = arith.constant dense<0.000000e+00> : vector<16x128xf32>
    %28 = tpu.matmul %17, %14, %cst_11 {dimension_numbers = #tpu.dot_dimension_numbers<[1], [0], [0], [1], [0, 0, 1, 1], [], []>} : vector<16x32xf32>, vector<32x128xf32>, vector<16x128xf32> -> vector<16x128xf32>
    %cst_12 = arith.constant dense<0xFF800000> : vector<128xf32>
    %29 = vector.multi_reduction <maximumf>, %28, %cst_12 [0] : vector<16x128xf32> to vector<128xf32>
    %30 = vector.shape_cast %29 : vector<128xf32> to vector<1x128xf32>
    %31 = vector.broadcast %30 : vector<1x128xf32> to vector<16x128xf32>
    %32 = arith.subf %28, %31 : vector<16x128xf32>
    %33 = vector.broadcast %27 : vector<1x128xf32> to vector<16x128xf32>
    %34 = arith.mulf %32, %33 : vector<16x128xf32>
    %35 = math.exp %34 : vector<16x128xf32>
    %cst_13 = arith.constant dense<0.000000e+00> : vector<128xf32>
    %36 = vector.multi_reduction <add>, %35, %cst_13 [0] : vector<16x128xf32> to vector<128xf32>
    %37 = vector.shape_cast %36 : vector<128xf32> to vector<1x128xf32>
    %38 = math.log %37 : vector<1x128xf32>
    %39 = arith.addf %15, %38 : vector<1x128xf32>
    %40 = vector.broadcast %30 : vector<1x128xf32> to vector<16x128xf32>
    %41 = arith.cmpf oeq, %28, %40 : vector<16x128xf32>
    %c16_i32 = arith.constant 16 : i32
    %42 = vector.broadcast %c16_i32 : i32 to vector<16x128xi32>
    %43 = arith.select %41, %6, %42 : vector<16x128xi1>, vector<16x128xi32>
    %cst_14 = arith.constant dense<2147483647> : vector<128xi32>
    %44 = vector.multi_reduction <minsi>, %43, %cst_14 [0] : vector<16x128xi32> to vector<128xi32>
    %45 = vector.shape_cast %44 : vector<128xi32> to vector<1x128xi32>
    %c16_i32_15 = arith.constant 16 : i32
    %c1_i32 = arith.constant 1 : i32
    %46 = arith.subi %c16_i32_15, %c1_i32 : i32
    %47 = vector.broadcast %46 : i32 to vector<1x128xi32>
    %48 = arith.minsi %45, %47 : vector<1x128xi32>
    %49 = vector.broadcast %48 : vector<1x128xi32> to vector<16x128xi32>
    %50 = arith.cmpi eq, %6, %49 : vector<16x128xi32>
    %51 = arith.extui %50 : vector<16x128xi1> to vector<16x128xi32>
    %52 = arith.sitofp %51 : vector<16x128xi32> to vector<16x128xf32>
    %cst_16 = arith.constant dense<0.000000e+00> : vector<32x128xf32>
    %53 = tpu.matmul %19, %52, %cst_16 {dimension_numbers = #tpu.dot_dimension_numbers<[1], [0], [0], [1], [0, 0, 1, 1], [], []>} : vector<32x16xf32>, vector<16x128xf32>, vector<32x128xf32> -> vector<32x128xf32>
    %54 = arith.subf %14, %53 : vector<32x128xf32>
    %c0_17 = arith.constant 0 : index
    %c0_18 = arith.constant 0 : index
    %55 = vector.load %arg5[%c0_17, %c0_18] : memref<3x128xi32, #tpu.memory_space<vmem>>, vector<1x128xi32>
    tpu.vector_store %arg5[%c0_17, %c0_18], %48 {strides = array<i32>} : memref<3x128xi32, #tpu.memory_space<vmem>>, vector<1x128xi32>,
    %c1 = arith.constant 1 : index
    %c0_19 = arith.constant 0 : index
    %c0_20 = arith.constant 0 : index
    %56 = vector.load %arg2[%c1, %c0_19, %c0_20] : memref<3x16x32xf32, #tpu.memory_space<vmem>>, vector<1x16x32xf32>
    %57 = vector.shape_cast %56 : vector<1x16x32xf32> to vector<16x32xf32>
    %c1_21 = arith.constant 1 : index
    %c0_22 = arith.constant 0 : index
    %c0_23 = arith.constant 0 : index
    %58 = vector.load %arg3[%c1_21, %c0_22, %c0_23] : memref<3x32x16xf32, #tpu.memory_space<vmem>>, vector<1x32x16xf32>
    %59 = vector.shape_cast %58 : vector<1x32x16xf32> to vector<32x16xf32>
    %60 = arith.mulf %54, %54 : vector<32x128xf32>
    %cst_24 = arith.constant dense<0.000000e+00> : vector<128xf32>
    %61 = vector.multi_reduction <add>, %60, %cst_24 [0] : vector<32x128xf32> to vector<128xf32>
    %62 = vector.shape_cast %61 : vector<128xf32> to vector<1x128xf32>
    %cst_25 = arith.constant 1.000000e-24 : f32
    %63 = vector.broadcast %cst_25 : f32 to vector<1x128xf32>
    %64 = arith.maximumf %62, %63 : vector<1x128xf32>
    %65 = math.rsqrt %64 : vector<1x128xf32>
    %cst_26 = arith.constant 5.000000e+00 : f32
    %66 = vector.broadcast %cst_26 : f32 to vector<1x128xf32>
    %67 = arith.mulf %65, %66 : vector<1x128xf32>
    %cst_27 = arith.constant dense<0.000000e+00> : vector<16x128xf32>
    %68 = tpu.matmul %57, %54, %cst_27 {dimension_numbers = #tpu.dot_dimension_numbers<[1], [0], [0], [1], [0, 0, 1, 1], [], []>} : vector<16x32xf32>, vector<32x128xf32>, vector<16x128xf32> -> vector<16x128xf32>
    %cst_28 = arith.constant dense<0xFF800000> : vector<128xf32>
    %69 = vector.multi_reduction <maximumf>, %68, %cst_28 [0] : vector<16x128xf32> to vector<128xf32>
    %70 = vector.shape_cast %69 : vector<128xf32> to vector<1x128xf32>
    %71 = vector.broadcast %70 : vector<1x128xf32> to vector<16x128xf32>
    %72 = arith.subf %68, %71 : vector<16x128xf32>
    %73 = vector.broadcast %67 : vector<1x128xf32> to vector<16x128xf32>
    %74 = arith.mulf %72, %73 : vector<16x128xf32>
    %75 = math.exp %74 : vector<16x128xf32>
    %cst_29 = arith.constant dense<0.000000e+00> : vector<128xf32>
    %76 = vector.multi_reduction <add>, %75, %cst_29 [0] : vector<16x128xf32> to vector<128xf32>
    %77 = vector.shape_cast %76 : vector<128xf32> to vector<1x128xf32>
    %78 = math.log %77 : vector<1x128xf32>
    %79 = arith.addf %39, %78 : vector<1x128xf32>
    %80 = vector.broadcast %70 : vector<1x128xf32> to vector<16x128xf32>
    %81 = arith.cmpf oeq, %68, %80 : vector<16x128xf32>
    %c16_i32_30 = arith.constant 16 : i32
    %82 = vector.broadcast %c16_i32_30 : i32 to vector<16x128xi32>
    %83 = arith.select %81, %6, %82 : vector<16x128xi1>, vector<16x128xi32>
    %cst_31 = arith.constant dense<2147483647> : vector<128xi32>
    %84 = vector.multi_reduction <minsi>, %83, %cst_31 [0] : vector<16x128xi32> to vector<128xi32>
    %85 = vector.shape_cast %84 : vector<128xi32> to vector<1x128xi32>
    %c16_i32_32 = arith.constant 16 : i32
    %c1_i32_33 = arith.constant 1 : i32
    %86 = arith.subi %c16_i32_32, %c1_i32_33 : i32
    %87 = vector.broadcast %86 : i32 to vector<1x128xi32>
    %88 = arith.minsi %85, %87 : vector<1x128xi32>
    %89 = vector.broadcast %88 : vector<1x128xi32> to vector<16x128xi32>
    %90 = arith.cmpi eq, %6, %89 : vector<16x128xi32>
    %91 = arith.extui %90 : vector<16x128xi1> to vector<16x128xi32>
    %92 = arith.sitofp %91 : vector<16x128xi32> to vector<16x128xf32>
    %cst_34 = arith.constant dense<0.000000e+00> : vector<32x128xf32>
    %93 = tpu.matmul %59, %92, %cst_34 {dimension_numbers = #tpu.dot_dimension_numbers<[1], [0], [0], [1], [0, 0, 1, 1], [], []>} : vector<32x16xf32>, vector<16x128xf32>, vector<32x128xf32> -> vector<32x128xf32>
    %94 = arith.subf %54, %93 : vector<32x128xf32>
    %95 = arith.addf %53, %93 : vector<32x128xf32>
    %c1_35 = arith.constant 1 : index
    %c0_36 = arith.constant 0 : index
    %96 = vector.load %arg5[%c1_35, %c0_36] : memref<3x128xi32, #tpu.memory_space<vmem>>, vector<1x128xi32>
    tpu.vector_store %arg5[%c1_35, %c0_36], %88 {strides = array<i32>} : memref<3x128xi32, #tpu.memory_space<vmem>>, vector<1x128xi32>,
    %c2 = arith.constant 2 : index
    %c0_37 = arith.constant 0 : index
    %c0_38 = arith.constant 0 : index
    %97 = vector.load %arg2[%c2, %c0_37, %c0_38] : memref<3x16x32xf32, #tpu.memory_space<vmem>>, vector<1x16x32xf32>
    %98 = vector.shape_cast %97 : vector<1x16x32xf32> to vector<16x32xf32>
    %c2_39 = arith.constant 2 : index
    %c0_40 = arith.constant 0 : index
    %c0_41 = arith.constant 0 : index
    %99 = vector.load %arg3[%c2_39, %c0_40, %c0_41] : memref<3x32x16xf32, #tpu.memory_space<vmem>>, vector<1x32x16xf32>
    %100 = vector.shape_cast %99 : vector<1x32x16xf32> to vector<32x16xf32>
    %101 = arith.mulf %94, %94 : vector<32x128xf32>
    %cst_42 = arith.constant dense<0.000000e+00> : vector<128xf32>
    %102 = vector.multi_reduction <add>, %101, %cst_42 [0] : vector<32x128xf32> to vector<128xf32>
    %103 = vector.shape_cast %102 : vector<128xf32> to vector<1x128xf32>
    %cst_43 = arith.constant 1.000000e-24 : f32
    %104 = vector.broadcast %cst_43 : f32 to vector<1x128xf32>
    %105 = arith.maximumf %103, %104 : vector<1x128xf32>
    %106 = math.rsqrt %105 : vector<1x128xf32>
    %cst_44 = arith.constant 5.000000e+00 : f32
    %107 = vector.broadcast %cst_44 : f32 to vector<1x128xf32>
    %108 = arith.mulf %106, %107 : vector<1x128xf32>
    %cst_45 = arith.constant dense<0.000000e+00> : vector<16x128xf32>
    %109 = tpu.matmul %98, %94, %cst_45 {dimension_numbers = #tpu.dot_dimension_numbers<[1], [0], [0], [1], [0, 0, 1, 1], [], []>} : vector<16x32xf32>, vector<32x128xf32>, vector<16x128xf32> -> vector<16x128xf32>
    %cst_46 = arith.constant dense<0xFF800000> : vector<128xf32>
    %110 = vector.multi_reduction <maximumf>, %109, %cst_46 [0] : vector<16x128xf32> to vector<128xf32>
    %111 = vector.shape_cast %110 : vector<128xf32> to vector<1x128xf32>
    %112 = vector.broadcast %111 : vector<1x128xf32> to vector<16x128xf32>
    %113 = arith.subf %109, %112 : vector<16x128xf32>
    %114 = vector.broadcast %108 : vector<1x128xf32> to vector<16x128xf32>
    %115 = arith.mulf %113, %114 : vector<16x128xf32>
    %116 = math.exp %115 : vector<16x128xf32>
    %cst_47 = arith.constant dense<0.000000e+00> : vector<128xf32>
    %117 = vector.multi_reduction <add>, %116, %cst_47 [0] : vector<16x128xf32> to vector<128xf32>
    %118 = vector.shape_cast %117 : vector<128xf32> to vector<1x128xf32>
    %119 = math.log %118 : vector<1x128xf32>
    %120 = arith.addf %79, %119 : vector<1x128xf32>
    %121 = vector.broadcast %111 : vector<1x128xf32> to vector<16x128xf32>
    %122 = arith.cmpf oeq, %109, %121 : vector<16x128xf32>
    %c16_i32_48 = arith.constant 16 : i32
    %123 = vector.broadcast %c16_i32_48 : i32 to vector<16x128xi32>
    %124 = arith.select %122, %6, %123 : vector<16x128xi1>, vector<16x128xi32>
    %cst_49 = arith.constant dense<2147483647> : vector<128xi32>
    %125 = vector.multi_reduction <minsi>, %124, %cst_49 [0] : vector<16x128xi32> to vector<128xi32>
    %126 = vector.shape_cast %125 : vector<128xi32> to vector<1x128xi32>
    %c16_i32_50 = arith.constant 16 : i32
    %c1_i32_51 = arith.constant 1 : i32
    %127 = arith.subi %c16_i32_50, %c1_i32_51 : i32
    %128 = vector.broadcast %127 : i32 to vector<1x128xi32>
    %129 = arith.minsi %126, %128 : vector<1x128xi32>
    %130 = vector.broadcast %129 : vector<1x128xi32> to vector<16x128xi32>
    %131 = arith.cmpi eq, %6, %130 : vector<16x128xi32>
    %132 = arith.extui %131 : vector<16x128xi1> to vector<16x128xi32>
    %133 = arith.sitofp %132 : vector<16x128xi32> to vector<16x128xf32>
    %cst_52 = arith.constant dense<0.000000e+00> : vector<32x128xf32>
    %134 = tpu.matmul %100, %133, %cst_52 {dimension_numbers = #tpu.dot_dimension_numbers<[1], [0], [0], [1], [0, 0, 1, 1], [], []>} : vector<32x16xf32>, vector<16x128xf32>, vector<32x128xf32> -> vector<32x128xf32>
    %135 = arith.addf %95, %134 : vector<32x128xf32>
    %c2_53 = arith.constant 2 : index
    %c0_54 = arith.constant 0 : index
    %136 = vector.load %arg5[%c2_53, %c0_54] : memref<3x128xi32, #tpu.memory_space<vmem>>, vector<1x128xi32>
    tpu.vector_store %arg5[%c2_53, %c0_54], %129 {strides = array<i32>} : memref<3x128xi32, #tpu.memory_space<vmem>>, vector<1x128xi32>,
    %cst_55 = arith.constant dense<0.000000e+00> : vector<128x32xf32>
    %137 = tpu.matmul %11, %135, %cst_55 {dimension_numbers = #tpu.dot_dimension_numbers<[1], [1], [0], [0], [0, 0, 1, 0], [], []>} : vector<128x128xf32>, vector<32x128xf32>, vector<128x32xf32> -> vector<128x32xf32>
    %c0_56 = arith.constant 0 : index
    %c0_57 = arith.constant 0 : index
    %138 = vector.load %arg4[%c0_56, %c0_57] : memref<128x32xf32, #tpu.memory_space<vmem>>, vector<128x32xf32>
    tpu.vector_store %arg4[%c0_56, %c0_57], %137 {strides = array<i32>} : memref<128x32xf32, #tpu.memory_space<vmem>>, vector<128x32xf32>,
    %c0_i32 = arith.constant 0 : i32
    %139 = arith.addi %12, %c0_i32 : i32
    %140 = vector.broadcast %139 : i32 to vector<1x128xi32>
    %141 = arith.addi %140, %5 : vector<1x128xi32>
    %c128_i32_58 = arith.constant 128 : i32
    %142 = vector.broadcast %c128_i32_58 : i32 to vector<1x128xi32>
    %143 = arith.cmpi slt, %141, %142 : vector<1x128xi32>
    %cst_59 = arith.constant 0.000000e+00 : f32
    %144 = vector.broadcast %cst_59 : f32 to vector<1x128xf32>
    %145 = arith.select %143, %120, %144 : vector<1x128xi1>, vector<1x128xf32>
    %146 = vector.shape_cast %145 : vector<1x128xf32> to vector<1x1x128xf32>
    %cst_60 = arith.constant dense<0.000000e+00> : vector<1xf32>
    %147 = vector.multi_reduction <add>, %146, %cst_60 [1, 2] : vector<1x1x128xf32> to vector<1xf32>
    %148 = vector.shape_cast %147 : vector<1xf32> to vector<1x1x1xf32>
    %149 = vector.extract %148[0, 0, 0] : f32 from vector<1x1x1xf32>
    %cst_61 = arith.constant 0.000000e+00 : f32
    %150 = arith.addf %cst_61, %149 : f32
    %151 = vector.broadcast %150 : f32 to vector<1x128xf32>
    %c0_62 = arith.constant 0 : index
    %c0_63 = arith.constant 0 : index
    %152 = vector.load %arg6[%c0_62, %c0_63] : memref<1x128xf32, #tpu.memory_space<vmem>>, vector<1x128xf32>
    tpu.vector_store %arg6[%c0_62, %c0_63], %151 {strides = array<i32>} : memref<1x128xf32, #tpu.memory_space<vmem>>, vector<1x128xf32>,
    return
  }
  func.func @transform_0(%arg0: i32) -> (i32, i32) {
    %c0_i32 = arith.constant 0 : i32
    %c0_i32_0 = arith.constant 0 : i32
    return %arg0, %c0_i32 : i32, i32
  }
  func.func @transform_1(%arg0: i32) -> (i32, i32, i32) {
    %c0_i32 = arith.constant 0 : i32
    %c0_i32_0 = arith.constant 0 : i32
    %c0_i32_1 = arith.constant 0 : i32
    %c0_i32_2 = arith.constant 0 : i32
    return %c0_i32, %c0_i32_0, %c0_i32_1 : i32, i32, i32
  }
  func.func @transform_2(%arg0: i32) -> (i32, i32, i32) {
    %c0_i32 = arith.constant 0 : i32
    %c0_i32_0 = arith.constant 0 : i32
    %c0_i32_1 = arith.constant 0 : i32
    %c0_i32_2 = arith.constant 0 : i32
    return %c0_i32, %c0_i32_0, %c0_i32_1 : i32, i32, i32
  }
  func.func @transform_3(%arg0: i32) -> (i32, i32) {
    %c0_i32 = arith.constant 0 : i32
    %c0_i32_0 = arith.constant 0 : i32
    return %arg0, %c0_i32 : i32, i32
  }
  func.func @transform_4(%arg0: i32) -> (i32, i32) {
    %c0_i32 = arith.constant 0 : i32
    %c0_i32_0 = arith.constant 0 : i32
    return %c0_i32, %arg0 : i32, i32
  }
  func.func @transform_5(%arg0: i32) -> (i32, i32) {
    %c0_i32 = arith.constant 0 : i32
    %c0_i32_0 = arith.constant 0 : i32
    return %arg0, %c0_i32 : i32, i32
  }
}

</mosaic_0001>

<llo_original>
// kernel: tpu_custom_call.1
$region0: #{tpu_custom_call.1}
  #allocation0 [shape = 'u32[]', space=smem, size = 0x4, offset = 0x4, fixed_abs, tag = 'smem constant byte address 0x4 - core index']
  #allocation1 [shape = 'u32[144,128]{1,0:T(1,128)}', space=vmem, size = 0x12000, scoped, tag = 'internal scratch']
  %s0 = inlined_call_operand.vmem [shape: f32[128,32], index: 0, kind: input, shape index: {}]
  %s1 = inlined_call_operand.vmem [shape: f32[3,16,32], index: 1, kind: input, shape index: {}]
  %s2 = inlined_call_operand.vmem [shape: f32[3,32,16], index: 2, kind: input, shape index: {}]
  %s3 = inlined_call_operand.vmem [shape: f32[128,32], index: 3, kind: output, shape index: {0}]
  %s4 = inlined_call_operand.hbm [shape: s32[3,128], index: 4, kind: output, shape index: {1}]
  %s5 = inlined_call_operand.hbm [shape: f32[1,128], index: 5, kind: output, shape index: {2}]
  %6 = xla_tuple %s3, %s4, %s5
  %s7 = sld [smem:[#allocation0]]
  $region38: #{tpu_custom_call.1} parent=0
    _
  %s9 = ssub.s32 1, %s7
  %s10 = scalar_select 0, %s9, %s7
  $region1: #{tpu_custom_call.1} parent=0
    #allocation2 [shape = 'u8[2048]{0}', space=vmem, size = 0x800, scoped, tag = 'output window, operand 1, single buffered']
    #allocation3 [shape = 's32[1]{0}', space=sflag, size = 0x4, scoped, tag = 'scoped memory for tpu_custom_call.1']
    #allocation4 [shape = 'u8[512]{0}', space=vmem, size = 0x400, scoped, tag = 'output window, operand 2, single buffered']
    #allocation5 [shape = 's32[1]{0}', space=sflag, size = 0x4, scoped, tag = 'scoped memory for tpu_custom_call.1']
    %11 = vsyncpa [#allocation3], 0
    %12 = vsyncpa [#allocation5], 0
    // Predicated region
    $region2: #{tpu_custom_call.1} parent=1 // pred_check
      _
    $region3: #{tpu_custom_call.1} parent=1 // pred_check_branch
      %14 = sbr.rel (0) target = $region5
    $region4: #{tpu_custom_call.1} parent=1 // pred_region
      _
    $region5: #{tpu_custom_call.1} parent=1 // pred_fallthru
      _
    // Predicated region
    $region6: #{tpu_custom_call.1} parent=1 // pred_check
      _
    $region7: #{tpu_custom_call.1} parent=1 // pred_check_branch
      %16 = sbr.rel (0) target = $region9
    $region8: #{tpu_custom_call.1} parent=1 // pred_region
      _
    $region9: #{tpu_custom_call.1} parent=1 // pred_fallthru
      _
    // Predicated region
    $region10: #{tpu_custom_call.1} parent=1 // pred_check
      _
    $region11: #{tpu_custom_call.1} parent=1 // pred_check_branch
      %18 = sbr.rel (0) target = $region13
    $region12: #{tpu_custom_call.1} parent=1 // pred_region
      _
    $region13: #{tpu_custom_call.1} parent=1 // pred_fallthru
      _
    %v19 = vlaneseq
    %v20 = vshrl.u32 %v19, 7
    %v21 = vadd.s32 %v20, 8
    %v22 = vadd.s32 %v20, 16
    %v23 = vadd.s32 %v20, 24
    %v24 = vlaneseq
    %v25 = vand.u32 %v24, 127
    %vm26 = vcmp.eq.s32.totalorder %v20, %v25
    %vm27 = vcmp.eq.s32.totalorder %v21, %v25
    %vm28 = vcmp.eq.s32.totalorder %v22, %v25
    %vm29 = vcmp.eq.s32.totalorder %v23, %v25
    %v30 = vsel %vm26, 1, 0
    %v31 = vsel %vm27, 1, 0
    %v32 = vsel %vm28, 1, 0
    %v33 = vsel %vm29, 1, 0
    %v34 = vcvt.s32.f32 %v30
    %v35 = vcvt.s32.f32 %v31
    %v36 = vcvt.s32.f32 %v32
    %v37 = vcvt.s32.f32 %v33
    %v38 = vadd.s32 %v20, 32
    %v39 = vadd.s32 %v20, 40
    %v40 = vadd.s32 %v20, 48
    %v41 = vadd.s32 %v20, 56
    %v42 = vadd.s32 %v20, 64
    %v43 = vadd.s32 %v20, 72
    %v44 = vadd.s32 %v20, 80
    %v45 = vadd.s32 %v20, 88
    %v46 = vadd.s32 %v20, 96
    %v47 = vadd.s32 %v20, 104
    %v48 = vadd.s32 %v20, 112
    %v49 = vadd.s32 %v20, 120
    %vm50 = vcmp.eq.s32.totalorder %v38, %v25
    %vm51 = vcmp.eq.s32.totalorder %v39, %v25
    %vm52 = vcmp.eq.s32.totalorder %v40, %v25
    %vm53 = vcmp.eq.s32.totalorder %v41, %v25
    %vm54 = vcmp.eq.s32.totalorder %v42, %v25
    %vm55 = vcmp.eq.s32.totalorder %v43, %v25
    %vm56 = vcmp.eq.s32.totalorder %v44, %v25
    %vm57 = vcmp.eq.s32.totalorder %v45, %v25
    %vm58 = vcmp.eq.s32.totalorder %v46, %v25
    %vm59 = vcmp.eq.s32.totalorder %v47, %v25
    %vm60 = vcmp.eq.s32.totalorder %v48, %v25
    %vm61 = vcmp.eq.s32.totalorder %v49, %v25
    %v62 = vsel %vm50, 1, 0
    %v63 = vsel %vm51, 1, 0
    %v64 = vsel %vm52, 1, 0
    %v65 = vsel %vm53, 1, 0
    %v66 = vsel %vm54, 1, 0
    %v67 = vsel %vm55, 1, 0
    %v68 = vsel %vm56, 1, 0
    %v69 = vsel %vm57, 1, 0
    %v70 = vsel %vm58, 1, 0
    %v71 = vsel %vm59, 1, 0
    %v72 = vsel %vm60, 1, 0
    %v73 = vsel %vm61, 1, 0
    %v74 = vcvt.s32.f32 %v62
    %v75 = vcvt.s32.f32 %v63
    %v76 = vcvt.s32.f32 %v64
    %v77 = vcvt.s32.f32 %v65
    %v78 = vcvt.s32.f32 %v66
    %v79 = vcvt.s32.f32 %v67
    %v80 = vcvt.s32.f32 %v68
    %v81 = vcvt.s32.f32 %v69
    %v82 = vcvt.s32.f32 %v70
    %v83 = vcvt.s32.f32 %v71
    %v84 = vcvt.s32.f32 %v72
    %v85 = vcvt.s32.f32 %v73
    %s86 = smul.u32 0, 128
    %v87 = vld [vmem:[%s0] sm:$0xff]
    %v88 = vld [vmem:[%s0 + $0x8] sm:$0xff]
    %v89 = vld [vmem:[%s0 + $0x10] sm:$0xff]
    %v90 = vld [vmem:[%s0 + $0x18] sm:$0xff]
    %v91 = vld [vmem:[%s0 + $0x20] sm:$0xff]
    %v92 = vld [vmem:[%s0 + $0x28] sm:$0xff]
    %v93 = vld [vmem:[%s0 + $0x30] sm:$0xff]
    %v94 = vld [vmem:[%s0 + $0x38] sm:$0xff]
    %v95 = vld [vmem:[%s0 + $0x40] sm:$0xff]
    %v96 = vld [vmem:[%s0 + $0x48] sm:$0xff]
    %v97 = vld [vmem:[%s0 + $0x50] sm:$0xff]
    %v98 = vld [vmem:[%s0 + $0x58] sm:$0xff]
    %v99 = vld [vmem:[%s0 + $0x60] sm:$0xff]
    %v100 = vld [vmem:[%s0 + $0x68] sm:$0xff]
    %v101 = vld [vmem:[%s0 + $0x70] sm:$0xff]
    %v102 = vld [vmem:[%s0 + $0x78] sm:$0xff]
    %vm103 = vcmask 261120
    %v105 = vsel %vm103, %v34, 0
    %v108 = vsel %vm103, %v35, 0
    %v111 = vsel %vm103, %v36, 0
    %v114 = vsel %vm103, %v37, 0
    %v117 = vsel %vm103, %v87, 0
    %v120 = vsel %vm103, %v88, 0
    %v123 = vsel %vm103, %v89, 0
    %v126 = vsel %vm103, %v90, 0
    %v129 = vsel %vm103, %v91, 0
    %v132 = vsel %vm103, %v92, 0
    %v135 = vsel %vm103, %v93, 0
    %v138 = vsel %vm103, %v94, 0
    %v141 = vsel %vm103, %v95, 0
    %v144 = vsel %vm103, %v96, 0
    %v147 = vsel %vm103, %v97, 0
    %v150 = vsel %vm103, %v98, 0
    %v153 = vsel %vm103, %v99, 0
    %v156 = vsel %vm103, %v100, 0
    %v159 = vsel %vm103, %v101, 0
    %v162 = vsel %vm103, %v102, 0
    %164 = vmatprep.subr.mxu0 0.0
    %165 = vmatpush1.xpose.msra.mxu0 %v117
    %166 = vmatprep.subr.mxu0 0.0
    %167 = vmatpush1.xpose.msra.mxu0 %v120
    %168 = vmatprep.subr.mxu0 0.0
    %169 = vmatpush1.xpose.msra.mxu0 %v123
    %170 = vmatprep.subr.mxu0 0.0
    %171 = vmatpush1.xpose.msra.mxu0 %v126
    %172 = vmatprep.subr.mxu0 0.0
    %173 = vmatpush1.xpose.msra.mxu0 %v129
    %174 = vmatprep.subr.mxu0 0.0
    %175 = vmatpush1.xpose.msra.mxu0 %v132
    %176 = vmatprep.subr.mxu0 0.0
    %177 = vmatpush1.xpose.msra.mxu0 %v135
    %178 = vmatprep.subr.mxu0 0.0
    %179 = vmatpush1.xpose.msra.mxu0 %v138
    %180 = vmatprep.subr.mxu0 0.0
    %181 = vmatpush1.xpose.msra.mxu0 %v141
    %182 = vmatprep.subr.mxu0 0.0
    %183 = vmatpush1.xpose.msra.mxu0 %v144
    %184 = vmatprep.subr.mxu0 0.0
    %185 = vmatpush1.xpose.msra.mxu0 %v147
    %186 = vmatprep.subr.mxu0 0.0
    %187 = vmatpush1.xpose.msra.mxu0 %v150
    %188 = vmatprep.subr.mxu0 0.0
    %189 = vmatpush1.xpose.msra.mxu0 %v153
    %190 = vmatprep.subr.mxu0 0.0
    %191 = vmatpush1.xpose.msra.mxu0 %v156
    %192 = vmatprep.subr.mxu0 0.0
    %193 = vmatpush1.xpose.msra.mxu0 %v159
    %194 = vmatprep.subr.mxu0 0.0
    %195 = vmatpush1.xpose.msra.mxu0 %v162
    %196 = vmatprep.subr.mxu0 0.0
    %197 = vmatpush1.xpose.msra.mxu0 0.0
    %198 = vmatprep.subr.mxu0 0.0
    %199 = vmatpush1.xpose.msra.mxu0 0.0
    %200 = vmatprep.subr.mxu0 0.0
    %201 = vmatpush1.xpose.msra.mxu0 0.0
    %202 = vmatprep.subr.mxu0 0.0
    %203 = vmatpush1.xpose.msra.mxu0 0.0
    %204 = vmatprep.subr.mxu0 0.0
    %205 = vmatpush1.xpose.msra.mxu0 0.0
    %206 = vmatprep.subr.mxu0 0.0
    %207 = vmatpush1.xpose.msra.mxu0 0.0
    %208 = vmatprep.subr.mxu0 0.0
    %209 = vmatpush1.xpose.msra.mxu0 0.0
    %210 = vmatprep.subr.mxu0 0.0
    %211 = vmatpush1.xpose.msra.mxu0 0.0
    %212 = vmatprep.subr.mxu0 0.0
    %213 = vmatpush1.xpose.msra.mxu0 0.0
    %214 = vmatprep.subr.mxu0 0.0
    %215 = vmatpush1.xpose.msra.mxu0 0.0
    %216 = vmatprep.subr.mxu0 0.0
    %217 = vmatpush1.xpose.msra.mxu0 0.0
    %218 = vmatprep.subr.mxu0 0.0
    %219 = vmatpush1.xpose.msra.mxu0 0.0
    %220 = vmatprep.subr.mxu0 0.0
    %221 = vmatpush1.xpose.msra.mxu0 0.0
    %222 = vmatprep.subr.mxu0 0.0
    %223 = vmatpush1.xpose.msra.mxu0 0.0
    %224 = vmatprep.subr.mxu0 0.0
    %225 = vmatpush1.xpose.msra.mxu0 0.0
    %226 = vmatprep.subr.mxu0 0.0
    %227 = vmatpush1.xpose.msra.mxu0 0.0
    %228 = vmatprep.mubr.f32.mxu0 0.0
    %229 = vmatmul.mubr.f32.gmra.mrb[0].mxu0 %v105
    %v230 = vpop.f32.mrb[0].mxu0
    %v231 = vadd.f32 0.0, %v230
    %v232 = vpop.f32.mrb[0].mxu0
    %233 = vmatprep.mubr.f32.mxu0 0.0
    %234 = vmatmul.mubr.f32.gmra.mrb[0].mxu0 %v108
    %v235 = vpop.f32.mrb[0].mxu0
    %v236 = vadd.f32 0.0, %v235
    %v237 = vpop.f32.mrb[0].mxu0
    %238 = vmatprep.mubr.f32.mxu0 0.0
    %239 = vmatmul.mubr.f32.gmra.mrb[0].mxu0 %v111
    %v240 = vpop.f32.mrb[0].mxu0
    %v241 = vadd.f32 0.0, %v240
    %v242 = vpop.f32.mrb[0].mxu0
    %243 = vmatprep.mubr.f32.mxu0 0.0
    %244 = vmatmul.mubr.f32.gmra.mrb[0].mxu0 %v114
    %v245 = vpop.f32.mrb[0].mxu0
    %v246 = vadd.f32 0.0, %v245
    %v247 = vpop.f32.mrb[0].mxu0
    %248 = vdwg.mxu0
    %v249 = vld [vmem:[%s1] sm:$0xff]
    %v250 = vld [vmem:[%s1 + $0x8] sm:$0xff]
    %v251 = vld [vmem:[%s2] sm:$0xff]
    %v252 = vld [vmem:[%s2 + $0x8] sm:$0xff]
    %v253 = vld [vmem:[%s2 + $0x10] sm:$0xff]
    %v254 = vld [vmem:[%s2 + $0x18] sm:$0xff]
    %v255 = vmul.f32 %v231, %v231
    %v256 = vmul.f32 %v236, %v236
    %v257 = vmul.f32 %v241, %v241
    %v258 = vmul.f32 %v246, %v246
    %v259 = vadd.f32 %v255, %v256
    %v260 = vadd.f32 %v259, %v257
    %v261 = vadd.f32 %v260, %v258
    %v262 = vrot.slane %v261, 4
    %v263 = vadd.f32 %v261, %v262
    %v264 = vrot.slane %v263, 2
    %v265 = vadd.f32 %v263, %v264
    %v266 = vrot.slane %v265, 1
    %v267 = vadd.f32 %v265, %v266
    %v268 = vmax.f32 %v267, 1e-24
    %v269 = vrsqrt.pop %v268
    %v270 = vmul.f32 %v269, 5.0
    %v272 = vsel %vm103, %v249, 0
    %v275 = vsel %vm103, %v250, 0
    %277 = vmatprep.subr.mxu0 0.0
    %278 = vmatpush1.msra.mxu0 %v231
    %279 = vmatprep.subr.mxu0 0.0
    %280 = vmatpush1.msra.mxu0 %v236
    %281 = vmatprep.subr.mxu0 0.0
    %282 = vmatpush1.msra.mxu0 %v241
    %283 = vmatprep.subr.mxu0 0.0
    %284 = vmatpush1.msra.mxu0 %v246
    %285 = vmatprep.subr.mxu0 0.0
    %286 = vmatpush1.msra.mxu0 0.0
    %287 = vmatprep.subr.mxu0 0.0
    %288 = vmatpush1.msra.mxu0 0.0
    %289 = vmatprep.subr.mxu0 0.0
    %290 = vmatpush1.msra.mxu0 0.0
    %291 = vmatprep.subr.mxu0 0.0
    %292 = vmatpush1.msra.mxu0 0.0
    %293 = vmatprep.subr.mxu0 0.0
    %294 = vmatpush1.msra.mxu0 0.0
    %295 = vmatprep.subr.mxu0 0.0
    %296 = vmatpush1.msra.mxu0 0.0
    %297 = vmatprep.subr.mxu0 0.0
    %298 = vmatpush1.msra.mxu0 0.0
    %299 = vmatprep.subr.mxu0 0.0
    %300 = vmatpush1.msra.mxu0 0.0
    %301 = vmatprep.subr.mxu0 0.0
    %302 = vmatpush1.msra.mxu0 0.0
    %303 = vmatprep.subr.mxu0 0.0
    %304 = vmatpush1.msra.mxu0 0.0
    %305 = vmatprep.subr.mxu0 0.0
    %306 = vmatpush1.msra.mxu0 0.0
    %307 = vmatprep.subr.mxu0 0.0
    %308 = vmatpush1.msra.mxu0 0.0
    %309 = vmatprep.subr.mxu0 0.0
    %310 = vmatpush1.msra.mxu0 0.0
    %311 = vmatprep.subr.mxu0 0.0
    %312 = vmatpush1.msra.mxu0 0.0
    %313 = vmatprep.subr.mxu0 0.0
    %314 = vmatpush1.msra.mxu0 0.0
    %315 = vmatprep.subr.mxu0 0.0
    %316 = vmatpush1.msra.mxu0 0.0
    %317 = vmatprep.subr.mxu0 0.0
    %318 = vmatpush1.msra.mxu0 0.0
    %319 = vmatprep.subr.mxu0 0.0
    %320 = vmatpush1.msra.mxu0 0.0
    %321 = vmatprep.subr.mxu0 0.0
    %322 = vmatpush1.msra.mxu0 0.0
    %323 = vmatprep.subr.mxu0 0.0
    %324 = vmatpush1.msra.mxu0 0.0
    %325 = vmatprep.subr.mxu0 0.0
    %326 = vmatpush1.msra.mxu0 0.0
    %327 = vmatprep.subr.mxu0 0.0
    %328 = vmatpush1.msra.mxu0 0.0
    %329 = vmatprep.subr.mxu0 0.0
    %330 = vmatpush1.msra.mxu0 0.0
    %331 = vmatprep.subr.mxu0 0.0
    %332 = vmatpush1.msra.mxu0 0.0
    %333 = vmatprep.subr.mxu0 0.0
    %334 = vmatpush1.msra.mxu0 0.0
    %335 = vmatprep.subr.mxu0 0.0
    %336 = vmatpush1.msra.mxu0 0.0
    %337 = vmatprep.subr.mxu0 0.0
    %338 = vmatpush1.msra.mxu0 0.0
    %339 = vmatprep.subr.mxu0 0.0
    %340 = vmatpush1.msra.mxu0 0.0
    %341 = vmatprep.mubr.f32.mxu0 0.0
    %342 = vmatmul.mubr.f32.gmra.mrb[0].mxu0 %v272
    %v343 = vpop.f32.mrb[0].mxu0
    %v344 = vadd.f32 0.0, %v343
    %v345 = vpop.f32.mrb[0].mxu0
    %346 = vmatprep.mubr.f32.mxu0 0.0
    %347 = vmatmul.mubr.f32.gmra.mrb[0].mxu0 %v275
    %v348 = vpop.f32.mrb[0].mxu0
    %v349 = vadd.f32 0.0, %v348
    %v350 = vpop.f32.mrb[0].mxu0
    %351 = vdwg.mxu0
    %v352 = vmax.f32 %v344, %v349
    %v353 = vrot.slane %v352, 4
    %v354 = vmax.f32 %v352, %v353
    %v355 = vrot.slane %v354, 2
    %v356 = vmax.f32 %v354, %v355
    %v357 = vrot.slane %v356, 1
    %v358 = vmax.f32 %v356, %v357
    %v359 = vsub.f32 %v344, %v358
    %v360 = vsub.f32 %v349, %v358
    %v361 = vmul.f32 %v359, %v270
    %v362 = vmul.f32 %v360, %v270
    %v363 = vmul.f32 %v361, 1.442695
    %v364 = vpow.pop %v363
    %v365 = vmul.f32 %v362, 1.442695
    %v366 = vpow.pop %v365
    %v367 = vadd.f32 %v364, %v366
    %v368 = vrot.slane %v367, 4
    %v369 = vadd.f32 %v367, %v368
    %v370 = vrot.slane %v369, 2
    %v371 = vadd.f32 %v369, %v370
    %v372 = vrot.slane %v371, 1
    %v373 = vadd.f32 %v371, %v372
    %v374 = vlog2.pop %v373
    %v375 = vmul.f32 %v374, 0.6931472
    %v376 = vadd.f32 %v375, 0.0
    %vm377 = vcmp.eq.f32.partialorder %v344, %v358
    %vm378 = vcmp.eq.f32.partialorder %v349, %v358
    %v379 = vsel %vm377, %v20, 16
    %v380 = vsel %vm378, %v21, 16
    %vm381 = vcmp.lt.s32.totalorder %v379, %v380
    %v382 = vsel %vm381, %v379, %v380
    %v383 = vrot.slane %v382, 4
    %vm384 = vcmp.lt.s32.totalorder %v382, %v383
    %v385 = vsel %vm384, %v382, %v383
    %v386 = vrot.slane %v385, 2
    %vm387 = vcmp.lt.s32.totalorder %v385, %v386
    %v388 = vsel %vm387, %v385, %v386
    %v389 = vrot.slane %v388, 1
    %vm390 = vcmp.lt.s32.totalorder %v388, %v389
    %v391 = vsel %vm390, %v388, %v389
    %vm392 = vcmp.lt.s32.totalorder %v391, 15
    %v393 = vsel %vm392, %v391, 15
    %vm394 = vcmp.eq.s32.totalorder %v20, %v393
    %vm395 = vcmp.eq.s32.totalorder %v21, %v393
    %v396 = vsel %vm394, 1, 0
    %v397 = vsel %vm395, 1, 0
    %v398 = vcvt.s32.f32 %v396
    %v399 = vcvt.s32.f32 %v397
    %vm400 = vcmask 130048
    %v402 = vsel %vm400, %v251, 0
    %v405 = vsel %vm400, %v252, 0
    %v408 = vsel %vm400, %v253, 0
    %v411 = vsel %vm400, %v254, 0
    %413 = vmatprep.subr.mxu0 0.0
    %414 = vmatpush1.msra.mxu0 %v398
    %415 = vmatprep.subr.mxu0 0.0
    %416 = vmatpush1.msra.mxu0 %v399
    %417 = vmatprep.subr.mxu0 0.0
    %418 = vmatpush1.msra.mxu0 0.0
    %419 = vmatprep.subr.mxu0 0.0
    %420 = vmatpush1.msra.mxu0 0.0
    %421 = vmatprep.subr.mxu0 0.0
    %422 = vmatpush1.msra.mxu0 0.0
    %423 = vmatprep.subr.mxu0 0.0
    %424 = vmatpush1.msra.mxu0 0.0
    %425 = vmatprep.subr.mxu0 0.0
    %426 = vmatpush1.msra.mxu0 0.0
    %427 = vmatprep.subr.mxu0 0.0
    %428 = vmatpush1.msra.mxu0 0.0
    %429 = vmatprep.subr.mxu0 0.0
    %430 = vmatpush1.msra.mxu0 0.0
    %431 = vmatprep.subr.mxu0 0.0
    %432 = vmatpush1.msra.mxu0 0.0
    %433 = vmatprep.subr.mxu0 0.0
    %434 = vmatpush1.msra.mxu0 0.0
    %435 = vmatprep.subr.mxu0 0.0
    %436 = vmatpush1.msra.mxu0 0.0
    %437 = vmatprep.subr.mxu0 0.0
    %438 = vmatpush1.msra.mxu0 0.0
    %439 = vmatprep.subr.mxu0 0.0
    %440 = vmatpush1.msra.mxu0 0.0
    %441 = vmatprep.subr.mxu0 0.0
    %442 = vmatpush1.msra.mxu0 0.0
    %443 = vmatprep.subr.mxu0 0.0
    %444 = vmatpush1.msra.mxu0 0.0
    %445 = vmatprep.subr.mxu0 0.0
    %446 = vmatpush1.msra.mxu0 0.0
    %447 = vmatprep.subr.mxu0 0.0
    %448 = vmatpush1.msra.mxu0 0.0
    %449 = vmatprep.subr.mxu0 0.0
    %450 = vmatpush1.msra.mxu0 0.0
    %451 = vmatprep.subr.mxu0 0.0
    %452 = vmatpush1.msra.mxu0 0.0
    %453 = vmatprep.subr.mxu0 0.0
    %454 = vmatpush1.msra.mxu0 0.0
    %455 = vmatprep.subr.mxu0 0.0
    %456 = vmatpush1.msra.mxu0 0.0
    %457 = vmatprep.subr.mxu0 0.0
    %458 = vmatpush1.msra.mxu0 0.0
    %459 = vmatprep.subr.mxu0 0.0
    %460 = vmatpush1.msra.mxu0 0.0
    %461 = vmatprep.subr.mxu0 0.0
    %462 = vmatpush1.msra.mxu0 0.0
    %463 = vmatprep.subr.mxu0 0.0
    %464 = vmatpush1.msra.mxu0 0.0
    %465 = vmatprep.subr.mxu0 0.0
    %466 = vmatpush1.msra.mxu0 0.0
    %467 = vmatprep.subr.mxu0 0.0
    %468 = vmatpush1.msra.mxu0 0.0
    %469 = vmatprep.subr.mxu0 0.0
    %470 = vmatpush1.msra.mxu0 0.0
    %471 = vmatprep.subr.mxu0 0.0
    %472 = vmatpush1.msra.mxu0 0.0
    %473 = vmatprep.subr.mxu0 0.0
    %474 = vmatpush1.msra.mxu0 0.0
    %475 = vmatprep.subr.mxu0 0.0
    %476 = vmatpush1.msra.mxu0 0.0
    %477 = vmatprep.mubr.f32.mxu0 0.0
    %478 = vmatmul.mubr.f32.gmra.mrb[0].mxu0 %v402
    %v479 = vpop.f32.mrb[0].mxu0
    %v480 = vadd.f32 0.0, %v479
    %v481 = vpop.f32.mrb[0].mxu0
    %482 = vmatprep.mubr.f32.mxu0 0.0
    %483 = vmatmul.mubr.f32.gmra.mrb[0].mxu0 %v405
    %v484 = vpop.f32.mrb[0].mxu0
    %v485 = vadd.f32 0.0, %v484
    %v486 = vpop.f32.mrb[0].mxu0
    %487 = vmatprep.mubr.f32.mxu0 0.0
    %488 = vmatmul.mubr.f32.gmra.mrb[0].mxu0 %v408
    %v489 = vpop.f32.mrb[0].mxu0
    %v490 = vadd.f32 0.0, %v489
    %v491 = vpop.f32.mrb[0].mxu0
    %492 = vmatprep.mubr.f32.mxu0 0.0
    %493 = vmatmul.mubr.f32.gmra.mrb[0].mxu0 %v411
    %v494 = vpop.f32.mrb[0].mxu0
    %v495 = vadd.f32 0.0, %v494
    %v496 = vpop.f32.mrb[0].mxu0
    %497 = vdwg.mxu0
    %v498 = vsub.f32 %v231, %v480
    %v499 = vsub.f32 %v236, %v485
    %v500 = vsub.f32 %v241, %v490
    %v501 = vsub.f32 %v246, %v495
    %502 = vst [vmem:[#allocation2] sm:$0x1] %v393
    %s503 = scalar_lea.vmem %s1, 16
    %v504 = vld [vmem:[%s503] sm:$0xff]
    %v505 = vld [vmem:[%s503 + $0x8] sm:$0xff]
    %s506 = scalar_lea.vmem %s2, 32
    %v507 = vld [vmem:[%s506] sm:$0xff]
    %v508 = vld [vmem:[%s506 + $0x8] sm:$0xff]
    %v509 = vld [vmem:[%s506 + $0x10] sm:$0xff]
    %v510 = vld [vmem:[%s506 + $0x18] sm:$0xff]
    %v511 = vmul.f32 %v498, %v498
    %v512 = vmul.f32 %v499, %v499
    %v513 = vmul.f32 %v500, %v500
    %v514 = vmul.f32 %v501, %v501
    %v515 = vadd.f32 %v511, %v512
    %v516 = vadd.f32 %v515, %v513
    %v517 = vadd.f32 %v516, %v514
    %v518 = vrot.slane %v517, 4
    %v519 = vadd.f32 %v517, %v518
    %v520 = vrot.slane %v519, 2
    %v521 = vadd.f32 %v519, %v520
    %v522 = vrot.slane %v521, 1
    %v523 = vadd.f32 %v521, %v522
    %v524 = vmax.f32 %v523, 1e-24
    %v525 = vrsqrt.pop %v524
    %v526 = vmul.f32 %v525, 5.0
    %v528 = vsel %vm103, %v504, 0
    %v531 = vsel %vm103, %v505, 0
    %533 = vmatprep.subr.mxu0 0.0
    %534 = vmatpush1.msra.mxu0 %v498
    %535 = vmatprep.subr.mxu0 0.0
    %536 = vmatpush1.msra.mxu0 %v499
    %537 = vmatprep.subr.mxu0 0.0
    %538 = vmatpush1.msra.mxu0 %v500
    %539 = vmatprep.subr.mxu0 0.0
    %540 = vmatpush1.msra.mxu0 %v501
    %541 = vmatprep.subr.mxu0 0.0
    %542 = vmatpush1.msra.mxu0 0.0
    %543 = vmatprep.subr.mxu0 0.0
    %544 = vmatpush1.msra.mxu0 0.0
    %545 = vmatprep.subr.mxu0 0.0
    %546 = vmatpush1.msra.mxu0 0.0
    %547 = vmatprep.subr.mxu0 0.0
    %548 = vmatpush1.msra.mxu0 0.0
    %549 = vmatprep.subr.mxu0 0.0
    %550 = vmatpush1.msra.mxu0 0.0
    %551 = vmatprep.subr.mxu0 0.0
    %552 = vmatpush1.msra.mxu0 0.0
    %553 = vmatprep.subr.mxu0 0.0
    %554 = vmatpush1.msra.mxu0 0.0
    %555 = vmatprep.subr.mxu0 0.0
    %556 = vmatpush1.msra.mxu0 0.0
    %557 = vmatprep.subr.mxu0 0.0
    %558 = vmatpush1.msra.mxu0 0.0
    %559 = vmatprep.subr.mxu0 0.0
    %560 = vmatpush1.msra.mxu0 0.0
    %561 = vmatprep.subr.mxu0 0.0
    %562 = vmatpush1.msra.mxu0 0.0
    %563 = vmatprep.subr.mxu0 0.0
    %564 = vmatpush1.msra.mxu0 0.0
    %565 = vmatprep.subr.mxu0 0.0
    %566 = vmatpush1.msra.mxu0 0.0
    %567 = vmatprep.subr.mxu0 0.0
    %568 = vmatpush1.msra.mxu0 0.0
    %569 = vmatprep.subr.mxu0 0.0
    %570 = vmatpush1.msra.mxu0 0.0
    %571 = vmatprep.subr.mxu0 0.0
    %572 = vmatpush1.msra.mxu0 0.0
    %573 = vmatprep.subr.mxu0 0.0
    %574 = vmatpush1.msra.mxu0 0.0
    %575 = vmatprep.subr.mxu0 0.0
    %576 = vmatpush1.msra.mxu0 0.0
    %577 = vmatprep.subr.mxu0 0.0
    %578 = vmatpush1.msra.mxu0 0.0
    %579 = vmatprep.subr.mxu0 0.0
    %580 = vmatpush1.msra.mxu0 0.0
    %581 = vmatprep.subr.mxu0 0.0
    %582 = vmatpush1.msra.mxu0 0.0
    %583 = vmatprep.subr.mxu0 0.0
    %584 = vmatpush1.msra.mxu0 0.0
    %585 = vmatprep.subr.mxu0 0.0
    %586 = vmatpush1.msra.mxu0 0.0
    %587 = vmatprep.subr.mxu0 0.0
    %588 = vmatpush1.msra.mxu0 0.0
    %589 = vmatprep.subr.mxu0 0.0
    %590 = vmatpush1.msra.mxu0 0.0
    %591 = vmatprep.subr.mxu0 0.0
    %592 = vmatpush1.msra.mxu0 0.0
    %593 = vmatprep.subr.mxu0 0.0
    %594 = vmatpush1.msra.mxu0 0.0
    %595 = vmatprep.subr.mxu0 0.0
    %596 = vmatpush1.msra.mxu0 0.0
    %597 = vmatprep.mubr.f32.mxu0 0.0
    %598 = vmatmul.mubr.f32.gmra.mrb[0].mxu0 %v528
    %v599 = vpop.f32.mrb[0].mxu0
    %v600 = vadd.f32 0.0, %v599
    %v601 = vpop.f32.mrb[0].mxu0
    %602 = vmatprep.mubr.f32.mxu0 0.0
    %603 = vmatmul.mubr.f32.gmra.mrb[0].mxu0 %v531
    %v604 = vpop.f32.mrb[0].mxu0
    %v605 = vadd.f32 0.0, %v604
    %v606 = vpop.f32.mrb[0].mxu0
    %607 = vdwg.mxu0
    %v608 = vmax.f32 %v600, %v605
    %v609 = vrot.slane %v608, 4
    %v610 = vmax.f32 %v608, %v609
    %v611 = vrot.slane %v610, 2
    %v612 = vmax.f32 %v610, %v611
    %v613 = vrot.slane %v612, 1
    %v614 = vmax.f32 %v612, %v613
    %v615 = vsub.f32 %v600, %v614
    %v616 = vsub.f32 %v605, %v614
    %v617 = vmul.f32 %v615, %v526
    %v618 = vmul.f32 %v616, %v526
    %v619 = vmul.f32 %v617, 1.442695
    %v620 = vpow.pop %v619
    %v621 = vmul.f32 %v618, 1.442695
    %v622 = vpow.pop %v621
    %v623 = vadd.f32 %v620, %v622
    %v624 = vrot.slane %v623, 4
    %v625 = vadd.f32 %v623, %v624
    %v626 = vrot.slane %v625, 2
    %v627 = vadd.f32 %v625, %v626
    %v628 = vrot.slane %v627, 1
    %v629 = vadd.f32 %v627, %v628
    %v630 = vlog2.pop %v629
    %v631 = vmul.f32 %v630, 0.6931472
    %v632 = vadd.f32 %v376, %v631
    %vm633 = vcmp.eq.f32.partialorder %v600, %v614
    %vm634 = vcmp.eq.f32.partialorder %v605, %v614
    %v635 = vsel %vm633, %v20, 16
    %v636 = vsel %vm634, %v21, 16
    %vm637 = vcmp.lt.s32.totalorder %v635, %v636
    %v638 = vsel %vm637, %v635, %v636
    %v639 = vrot.slane %v638, 4
    %vm640 = vcmp.lt.s32.totalorder %v638, %v639
    %v641 = vsel %vm640, %v638, %v639
    %v642 = vrot.slane %v641, 2
    %vm643 = vcmp.lt.s32.totalorder %v641, %v642
    %v644 = vsel %vm643, %v641, %v642
    %v645 = vrot.slane %v644, 1
    %vm646 = vcmp.lt.s32.totalorder %v644, %v645
    %v647 = vsel %vm646, %v644, %v645
    %vm648 = vcmp.lt.s32.totalorder %v647, 15
    %v649 = vsel %vm648, %v647, 15
    %vm650 = vcmp.eq.s32.totalorder %v20, %v649
    %vm651 = vcmp.eq.s32.totalorder %v21, %v649
    %v652 = vsel %vm650, 1, 0
    %v653 = vsel %vm651, 1, 0
    %v654 = vcvt.s32.f32 %v652
    %v655 = vcvt.s32.f32 %v653
    %v657 = vsel %vm400, %v507, 0
    %v660 = vsel %vm400, %v508, 0
    %v663 = vsel %vm400, %v509, 0
    %v666 = vsel %vm400, %v510, 0
    %668 = vmatprep.subr.mxu0 0.0
    %669 = vmatpush1.msra.mxu0 %v654
    %670 = vmatprep.subr.mxu0 0.0
    %671 = vmatpush1.msra.mxu0 %v655
    %672 = vmatprep.subr.mxu0 0.0
    %673 = vmatpush1.msra.mxu0 0.0
    %674 = vmatprep.subr.mxu0 0.0
    %675 = vmatpush1.msra.mxu0 0.0
    %676 = vmatprep.subr.mxu0 0.0
    %677 = vmatpush1.msra.mxu0 0.0
    %678 = vmatprep.subr.mxu0 0.0
    %679 = vmatpush1.msra.mxu0 0.0
    %680 = vmatprep.subr.mxu0 0.0
    %681 = vmatpush1.msra.mxu0 0.0
    %682 = vmatprep.subr.mxu0 0.0
    %683 = vmatpush1.msra.mxu0 0.0
    %684 = vmatprep.subr.mxu0 0.0
    %685 = vmatpush1.msra.mxu0 0.0
    %686 = vmatprep.subr.mxu0 0.0
    %687 = vmatpush1.msra.mxu0 0.0
    %688 = vmatprep.subr.mxu0 0.0
    %689 = vmatpush1.msra.mxu0 0.0
    %690 = vmatprep.subr.mxu0 0.0
    %691 = vmatpush1.msra.mxu0 0.0
    %692 = vmatprep.subr.mxu0 0.0
    %693 = vmatpush1.msra.mxu0 0.0
    %694 = vmatprep.subr.mxu0 0.0
    %695 = vmatpush1.msra.mxu0 0.0
    %696 = vmatprep.subr.mxu0 0.0
    %697 = vmatpush1.msra.mxu0 0.0
    %698 = vmatprep.subr.mxu0 0.0
    %699 = vmatpush1.msra.mxu0 0.0
    %700 = vmatprep.subr.mxu0 0.0
    %701 = vmatpush1.msra.mxu0 0.0
    %702 = vmatprep.subr.mxu0 0.0
    %703 = vmatpush1.msra.mxu0 0.0
    %704 = vmatprep.subr.mxu0 0.0
    %705 = vmatpush1.msra.mxu0 0.0
    %706 = vmatprep.subr.mxu0 0.0
    %707 = vmatpush1.msra.mxu0 0.0
    %708 = vmatprep.subr.mxu0 0.0
    %709 = vmatpush1.msra.mxu0 0.0
    %710 = vmatprep.subr.mxu0 0.0
    %711 = vmatpush1.msra.mxu0 0.0
    %712 = vmatprep.subr.mxu0 0.0
    %713 = vmatpush1.msra.mxu0 0.0
    %714 = vmatprep.subr.mxu0 0.0
    %715 = vmatpush1.msra.mxu0 0.0
    %716 = vmatprep.subr.mxu0 0.0
    %717 = vmatpush1.msra.mxu0 0.0
    %718 = vmatprep.subr.mxu0 0.0
    %719 = vmatpush1.msra.mxu0 0.0
    %720 = vmatprep.subr.mxu0 0.0
    %721 = vmatpush1.msra.mxu0 0.0
    %722 = vmatprep.subr.mxu0 0.0
    %723 = vmatpush1.msra.mxu0 0.0
    %724 = vmatprep.subr.mxu0 0.0
    %725 = vmatpush1.msra.mxu0 0.0
    %726 = vmatprep.subr.mxu0 0.0
    %727 = vmatpush1.msra.mxu0 0.0
    %728 = vmatprep.subr.mxu0 0.0
    %729 = vmatpush1.msra.mxu0 0.0
    %730 = vmatprep.subr.mxu0 0.0
    %731 = vmatpush1.msra.mxu0 0.0
    %732 = vmatprep.mubr.f32.mxu0 0.0
    %733 = vmatmul.mubr.f32.gmra.mrb[0].mxu0 %v657
    %v734 = vpop.f32.mrb[0].mxu0
    %v735 = vadd.f32 0.0, %v734
    %v736 = vpop.f32.mrb[0].mxu0
    %737 = vmatprep.mubr.f32.mxu0 0.0
    %738 = vmatmul.mubr.f32.gmra.mrb[0].mxu0 %v660
    %v739 = vpop.f32.mrb[0].mxu0
    %v740 = vadd.f32 0.0, %v739
    %v741 = vpop.f32.mrb[0].mxu0
    %742 = vmatprep.mubr.f32.mxu0 0.0
    %743 = vmatmul.mubr.f32.gmra.mrb[0].mxu0 %v663
    %v744 = vpop.f32.mrb[0].mxu0
    %v745 = vadd.f32 0.0, %v744
    %v746 = vpop.f32.mrb[0].mxu0
    %747 = vmatprep.mubr.f32.mxu0 0.0
    %748 = vmatmul.mubr.f32.gmra.mrb[0].mxu0 %v666
    %v749 = vpop.f32.mrb[0].mxu0
    %v750 = vadd.f32 0.0, %v749
    %v751 = vpop.f32.mrb[0].mxu0
    %752 = vdwg.mxu0
    %v753 = vsub.f32 %v498, %v735
    %v754 = vsub.f32 %v499, %v740
    %v755 = vsub.f32 %v500, %v745
    %v756 = vsub.f32 %v501, %v750
    %v757 = vadd.f32 %v480, %v735
    %v758 = vadd.f32 %v485, %v740
    %v759 = vadd.f32 %v490, %v745
    %v760 = vadd.f32 %v495, %v750
    %761 = vst [vmem:[#allocation2 + $0x1] sm:$0x1] %v649
    %s762 = scalar_lea.vmem %s1, 32
    %v763 = vld [vmem:[%s762] sm:$0xff]
    %v764 = vld [vmem:[%s762 + $0x8] sm:$0xff]
    %s765 = scalar_lea.vmem %s2, 64
    %v766 = vld [vmem:[%s765] sm:$0xff]
    %v767 = vld [vmem:[%s765 + $0x8] sm:$0xff]
    %v768 = vld [vmem:[%s765 + $0x10] sm:$0xff]
    %v769 = vld [vmem:[%s765 + $0x18] sm:$0xff]
    %v770 = vmul.f32 %v753, %v753
    %v771 = vmul.f32 %v754, %v754
    %v772 = vmul.f32 %v755, %v755
    %v773 = vmul.f32 %v756, %v756
    %v774 = vadd.f32 %v770, %v771
    %v775 = vadd.f32 %v774, %v772
    %v776 = vadd.f32 %v775, %v773
    %v777 = vrot.slane %v776, 4
    %v778 = vadd.f32 %v776, %v777
    %v779 = vrot.slane %v778, 2
    %v780 = vadd.f32 %v778, %v779
    %v781 = vrot.slane %v780, 1
    %v782 = vadd.f32 %v780, %v781
    %v783 = vmax.f32 %v782, 1e-24
    %v784 = vrsqrt.pop %v783
    %v785 = vmul.f32 %v784, 5.0
    %v787 = vsel %vm103, %v763, 0
    %v790 = vsel %vm103, %v764, 0
    %792 = vmatprep.subr.mxu0 0.0
    %793 = vmatpush1.msra.mxu0 %v753
    %794 = vmatprep.subr.mxu0 0.0
    %795 = vmatpush1.msra.mxu0 %v754
    %796 = vmatprep.subr.mxu0 0.0
    %797 = vmatpush1.msra.mxu0 %v755
    %798 = vmatprep.subr.mxu0 0.0
    %799 = vmatpush1.msra.mxu0 %v756
    %800 = vmatprep.subr.mxu0 0.0
    %801 = vmatpush1.msra.mxu0 0.0
    %802 = vmatprep.subr.mxu0 0.0
    %803 = vmatpush1.msra.mxu0 0.0
    %804 = vmatprep.subr.mxu0 0.0
    %805 = vmatpush1.msra.mxu0 0.0
    %806 = vmatprep.subr.mxu0 0.0
    %807 = vmatpush1.msra.mxu0 0.0
    %808 = vmatprep.subr.mxu0 0.0
    %809 = vmatpush1.msra.mxu0 0.0
    %810 = vmatprep.subr.mxu0 0.0
    %811 = vmatpush1.msra.mxu0 0.0
    %812 = vmatprep.subr.mxu0 0.0
    %813 = vmatpush1.msra.mxu0 0.0
    %814 = vmatprep.subr.mxu0 0.0
    %815 = vmatpush1.msra.mxu0 0.0
    %816 = vmatprep.subr.mxu0 0.0
    %817 = vmatpush1.msra.mxu0 0.0
    %818 = vmatprep.subr.mxu0 0.0
    %819 = vmatpush1.msra.mxu0 0.0
    %820 = vmatprep.subr.mxu0 0.0
    %821 = vmatpush1.msra.mxu0 0.0
    %822 = vmatprep.subr.mxu0 0.0
    %823 = vmatpush1.msra.mxu0 0.0
    %824 = vmatprep.subr.mxu0 0.0
    %825 = vmatpush1.msra.mxu0 0.0
    %826 = vmatprep.subr.mxu0 0.0
    %827 = vmatpush1.msra.mxu0 0.0
    %828 = vmatprep.subr.mxu0 0.0
    %829 = vmatpush1.msra.mxu0 0.0
    %830 = vmatprep.subr.mxu0 0.0
    %831 = vmatpush1.msra.mxu0 0.0
    %832 = vmatprep.subr.mxu0 0.0
    %833 = vmatpush1.msra.mxu0 0.0
    %834 = vmatprep.subr.mxu0 0.0
    %835 = vmatpush1.msra.mxu0 0.0
    %836 = vmatprep.subr.mxu0 0.0
    %837 = vmatpush1.msra.mxu0 0.0
    %838 = vmatprep.subr.mxu0 0.0
    %839 = vmatpush1.msra.mxu0 0.0
    %840 = vmatprep.subr.mxu0 0.0
    %841 = vmatpush1.msra.mxu0 0.0
    %842 = vmatprep.subr.mxu0 0.0
    %843 = vmatpush1.msra.mxu0 0.0
    %844 = vmatprep.subr.mxu0 0.0
    %845 = vmatpush1.msra.mxu0 0.0
    %846 = vmatprep.subr.mxu0 0.0
    %847 = vmatpush1.msra.mxu0 0.0
    %848 = vmatprep.subr.mxu0 0.0
    %849 = vmatpush1.msra.mxu0 0.0
    %850 = vmatprep.subr.mxu0 0.0
    %851 = vmatpush1.msra.mxu0 0.0
    %852 = vmatprep.subr.mxu0 0.0
    %853 = vmatpush1.msra.mxu0 0.0
    %854 = vmatprep.subr.mxu0 0.0
    %855 = vmatpush1.msra.mxu0 0.0
    %856 = vmatprep.mubr.f32.mxu0 0.0
    %857 = vmatmul.mubr.f32.gmra.mrb[0].mxu0 %v787
    %v858 = vpop.f32.mrb[0].mxu0
    %v859 = vadd.f32 0.0, %v858
    %v860 = vpop.f32.mrb[0].mxu0
    %861 = vmatprep.mubr.f32.mxu0 0.0
    %862 = vmatmul.mubr.f32.gmra.mrb[0].mxu0 %v790
    %v863 = vpop.f32.mrb[0].mxu0
    %v864 = vadd.f32 0.0, %v863
    %v865 = vpop.f32.mrb[0].mxu0
    %866 = vdwg.mxu0
    %v867 = vmax.f32 %v859, %v864
    %v868 = vrot.slane %v867, 4
    %v869 = vmax.f32 %v867, %v868
    %v870 = vrot.slane %v869, 2
    %v871 = vmax.f32 %v869, %v870
    %v872 = vrot.slane %v871, 1
    %v873 = vmax.f32 %v871, %v872
    %v874 = vsub.f32 %v859, %v873
    %v875 = vsub.f32 %v864, %v873
    %v876 = vmul.f32 %v874, %v785
    %v877 = vmul.f32 %v875, %v785
    %v878 = vmul.f32 %v876, 1.442695
    %v879 = vpow.pop %v878
    %v880 = vmul.f32 %v877, 1.442695
    %v881 = vpow.pop %v880
    %v882 = vadd.f32 %v879, %v881
    %v883 = vrot.slane %v882, 4
    %v884 = vadd.f32 %v882, %v883
    %v885 = vrot.slane %v884, 2
    %v886 = vadd.f32 %v884, %v885
    %v887 = vrot.slane %v886, 1
    %v888 = vadd.f32 %v886, %v887
    %v889 = vlog2.pop %v888
    %v890 = vmul.f32 %v889, 0.6931472
    %v891 = vadd.f32 %v632, %v890
    %vm892 = vcmp.eq.f32.partialorder %v859, %v873
    %vm893 = vcmp.eq.f32.partialorder %v864, %v873
    %v894 = vsel %vm892, %v20, 16
    %v895 = vsel %vm893, %v21, 16
    %vm896 = vcmp.lt.s32.totalorder %v894, %v895
    %v897 = vsel %vm896, %v894, %v895
    %v898 = vrot.slane %v897, 4
    %vm899 = vcmp.lt.s32.totalorder %v897, %v898
    %v900 = vsel %vm899, %v897, %v898
    %v901 = vrot.slane %v900, 2
    %vm902 = vcmp.lt.s32.totalorder %v900, %v901
    %v903 = vsel %vm902, %v900, %v901
    %v904 = vrot.slane %v903, 1
    %vm905 = vcmp.lt.s32.totalorder %v903, %v904
    %v906 = vsel %vm905, %v903, %v904
    %vm907 = vcmp.lt.s32.totalorder %v906, 15
    %v908 = vsel %vm907, %v906, 15
    %vm909 = vcmp.eq.s32.totalorder %v20, %v908
    %vm910 = vcmp.eq.s32.totalorder %v21, %v908
    %v911 = vsel %vm909, 1, 0
    %v912 = vsel %vm910, 1, 0
    %v913 = vcvt.s32.f32 %v911
    %v914 = vcvt.s32.f32 %v912
    %v916 = vsel %vm400, %v766, 0
    %v919 = vsel %vm400, %v767, 0
    %v922 = vsel %vm400, %v768, 0
    %v925 = vsel %vm400, %v769, 0
    %927 = vmatprep.subr.mxu0 0.0
    %928 = vmatpush1.msra.mxu0 %v913
    %929 = vmatprep.subr.mxu0 0.0
    %930 = vmatpush1.msra.mxu0 %v914
    %931 = vmatprep.subr.mxu0 0.0
    %932 = vmatpush1.msra.mxu0 0.0
    %933 = vmatprep.subr.mxu0 0.0
    %934 = vmatpush1.msra.mxu0 0.0
    %935 = vmatprep.subr.mxu0 0.0
    %936 = vmatpush1.msra.mxu0 0.0
    %937 = vmatprep.subr.mxu0 0.0
    %938 = vmatpush1.msra.mxu0 0.0
    %939 = vmatprep.subr.mxu0 0.0
    %940 = vmatpush1.msra.mxu0 0.0
    %941 = vmatprep.subr.mxu0 0.0
    %942 = vmatpush1.msra.mxu0 0.0
    %943 = vmatprep.subr.mxu0 0.0
    %944 = vmatpush1.msra.mxu0 0.0
    %945 = vmatprep.subr.mxu0 0.0
    %946 = vmatpush1.msra.mxu0 0.0
    %947 = vmatprep.subr.mxu0 0.0
    %948 = vmatpush1.msra.mxu0 0.0
    %949 = vmatprep.subr.mxu0 0.0
    %950 = vmatpush1.msra.mxu0 0.0
    %951 = vmatprep.subr.mxu0 0.0
    %952 = vmatpush1.msra.mxu0 0.0
    %953 = vmatprep.subr.mxu0 0.0
    %954 = vmatpush1.msra.mxu0 0.0
    %955 = vmatprep.subr.mxu0 0.0
    %956 = vmatpush1.msra.mxu0 0.0
    %957 = vmatprep.subr.mxu0 0.0
    %958 = vmatpush1.msra.mxu0 0.0
    %959 = vmatprep.subr.mxu0 0.0
    %960 = vmatpush1.msra.mxu0 0.0
    %961 = vmatprep.subr.mxu0 0.0
    %962 = vmatpush1.msra.mxu0 0.0
    %963 = vmatprep.subr.mxu0 0.0
    %964 = vmatpush1.msra.mxu0 0.0
    %965 = vmatprep.subr.mxu0 0.0
    %966 = vmatpush1.msra.mxu0 0.0
    %967 = vmatprep.subr.mxu0 0.0
    %968 = vmatpush1.msra.mxu0 0.0
    %969 = vmatprep.subr.mxu0 0.0
    %970 = vmatpush1.msra.mxu0 0.0
    %971 = vmatprep.subr.mxu0 0.0
    %972 = vmatpush1.msra.mxu0 0.0
    %973 = vmatprep.subr.mxu0 0.0
    %974 = vmatpush1.msra.mxu0 0.0
    %975 = vmatprep.subr.mxu0 0.0
    %976 = vmatpush1.msra.mxu0 0.0
    %977 = vmatprep.subr.mxu0 0.0
    %978 = vmatpush1.msra.mxu0 0.0
    %979 = vmatprep.subr.mxu0 0.0
    %980 = vmatpush1.msra.mxu0 0.0
    %981 = vmatprep.subr.mxu0 0.0
    %982 = vmatpush1.msra.mxu0 0.0
    %983 = vmatprep.subr.mxu0 0.0
    %984 = vmatpush1.msra.mxu0 0.0
    %985 = vmatprep.subr.mxu0 0.0
    %986 = vmatpush1.msra.mxu0 0.0
    %987 = vmatprep.subr.mxu0 0.0
    %988 = vmatpush1.msra.mxu0 0.0
    %989 = vmatprep.subr.mxu0 0.0
    %990 = vmatpush1.msra.mxu0 0.0
    %991 = vmatprep.mubr.f32.mxu0 0.0
    %992 = vmatmul.mubr.f32.gmra.mrb[0].mxu0 %v916
    %v993 = vpop.f32.mrb[0].mxu0
    %v994 = vadd.f32 0.0, %v993
    %v995 = vpop.f32.mrb[0].mxu0
    %996 = vmatprep.mubr.f32.mxu0 0.0
    %997 = vmatmul.mubr.f32.gmra.mrb[0].mxu0 %v919
    %v998 = vpop.f32.mrb[0].mxu0
    %v999 = vadd.f32 0.0, %v998
    %v1000 = vpop.f32.mrb[0].mxu0
    %1001 = vmatprep.mubr.f32.mxu0 0.0
    %1002 = vmatmul.mubr.f32.gmra.mrb[0].mxu0 %v922
    %v1003 = vpop.f32.mrb[0].mxu0
    %v1004 = vadd.f32 0.0, %v1003
    %v1005 = vpop.f32.mrb[0].mxu0
    %1006 = vmatprep.mubr.f32.mxu0 0.0
    %1007 = vmatmul.mubr.f32.gmra.mrb[0].mxu0 %v925
    %v1008 = vpop.f32.mrb[0].mxu0
    %v1009 = vadd.f32 0.0, %v1008
    %v1010 = vpop.f32.mrb[0].mxu0
    %1011 = vdwg.mxu0
    %v1012 = vadd.f32 %v757, %v994
    %v1013 = vadd.f32 %v758, %v999
    %v1014 = vadd.f32 %v759, %v1004
    %v1015 = vadd.f32 %v760, %v1009
    %1016 = vst [vmem:[#allocation2 + $0x2] sm:$0x1] %v908
    %1017 = vmatprep.subr.mxu0 0.0
    %1018 = vmatpush1.xpose.msra.mxu0 %v1012
    %1019 = vmatprep.subr.mxu0 0.0
    %1020 = vmatpush1.xpose.msra.mxu0 %v1013
    %1021 = vmatprep.subr.mxu0 0.0
    %1022 = vmatpush1.xpose.msra.mxu0 %v1014
    %1023 = vmatprep.subr.mxu0 0.0
    %1024 = vmatpush1.xpose.msra.mxu0 %v1015
    %1025 = vmatprep.subr.mxu0 0.0
    %1026 = vmatpush1.xpose.msra.mxu0 0.0
    %1027 = vmatprep.subr.mxu0 0.0
    %1028 = vmatpush1.xpose.msra.mxu0 0.0
    %1029 = vmatprep.subr.mxu0 0.0
    %1030 = vmatpush1.xpose.msra.mxu0 0.0
    %1031 = vmatprep.subr.mxu0 0.0
    %1032 = vmatpush1.xpose.msra.mxu0 0.0
    %1033 = vmatprep.subr.mxu0 0.0
    %1034 = vmatpush1.xpose.msra.mxu0 0.0
    %1035 = vmatprep.subr.mxu0 0.0
    %1036 = vmatpush1.xpose.msra.mxu0 0.0
    %1037 = vmatprep.subr.mxu0 0.0
    %1038 = vmatpush1.xpose.msra.mxu0 0.0
    %1039 = vmatprep.subr.mxu0 0.0
    %1040 = vmatpush1.xpose.msra.mxu0 0.0
    %1041 = vmatprep.subr.mxu0 0.0
    %1042 = vmatpush1.xpose.msra.mxu0 0.0
    %1043 = vmatprep.subr.mxu0 0.0
    %1044 = vmatpush1.xpose.msra.mxu0 0.0
    %1045 = vmatprep.subr.mxu0 0.0
    %1046 = vmatpush1.xpose.msra.mxu0 0.0
    %1047 = vmatprep.subr.mxu0 0.0
    %1048 = vmatpush1.xpose.msra.mxu0 0.0
    %1049 = vmatprep.subr.mxu0 0.0
    %1050 = vmatpush1.xpose.msra.mxu0 0.0
    %1051 = vmatprep.subr.mxu0 0.0
    %1052 = vmatpush1.xpose.msra.mxu0 0.0
    %1053 = vmatprep.subr.mxu0 0.0
    %1054 = vmatpush1.xpose.msra.mxu0 0.0
    %1055 = vmatprep.subr.mxu0 0.0
    %1056 = vmatpush1.xpose.msra.mxu0 0.0
    %1057 = vmatprep.subr.mxu0 0.0
    %1058 = vmatpush1.xpose.msra.mxu0 0.0
    %1059 = vmatprep.subr.mxu0 0.0
    %1060 = vmatpush1.xpose.msra.mxu0 0.0
    %1061 = vmatprep.subr.mxu0 0.0
    %1062 = vmatpush1.xpose.msra.mxu0 0.0
    %1063 = vmatprep.subr.mxu0 0.0
    %1064 = vmatpush1.xpose.msra.mxu0 0.0
    %1065 = vmatprep.subr.mxu0 0.0
    %1066 = vmatpush1.xpose.msra.mxu0 0.0
    %1067 = vmatprep.subr.mxu0 0.0
    %1068 = vmatpush1.xpose.msra.mxu0 0.0
    %1069 = vmatprep.subr.mxu0 0.0
    %1070 = vmatpush1.xpose.msra.mxu0 0.0
    %1071 = vmatprep.subr.mxu0 0.0
    %1072 = vmatpush1.xpose.msra.mxu0 0.0
    %1073 = vmatprep.subr.mxu0 0.0
    %1074 = vmatpush1.xpose.msra.mxu0 0.0
    %1075 = vmatprep.subr.mxu0 0.0
    %1076 = vmatpush1.xpose.msra.mxu0 0.0
    %1077 = vmatprep.subr.mxu0 0.0
    %1078 = vmatpush1.xpose.msra.mxu0 0.0
    %1079 = vmatprep.subr.mxu0 0.0
    %1080 = vmatpush1.xpose.msra.mxu0 0.0
    %1081 = vmatprep.mubr.f32.mxu0 0.0
    %1082 = vmatmul.mubr.f32.gmra.mrb[0].mxu0 %v34
    %v1083 = vpop.f32.mrb[0].mxu0
    %v1084 = vadd.f32 0.0, %v1083
    %v1085 = vpop.f32.mrb[0].mxu0
    %1086 = vmatprep.mubr.f32.mxu0 0.0
    %1087 = vmatmul.mubr.f32.gmra.mrb[0].mxu0 %v35
    %v1088 = vpop.f32.mrb[0].mxu0
    %v1089 = vadd.f32 0.0, %v1088
    %v1090 = vpop.f32.mrb[0].mxu0
    %1091 = vmatprep.mubr.f32.mxu0 0.0
    %1092 = vmatmul.mubr.f32.gmra.mrb[0].mxu0 %v36
    %v1093 = vpop.f32.mrb[0].mxu0
    %v1094 = vadd.f32 0.0, %v1093
    %v1095 = vpop.f32.mrb[0].mxu0
    %1096 = vmatprep.mubr.f32.mxu0 0.0
    %1097 = vmatmul.mubr.f32.gmra.mrb[0].mxu0 %v37
    %v1098 = vpop.f32.mrb[0].mxu0
    %v1099 = vadd.f32 0.0, %v1098
    %v1100 = vpop.f32.mrb[0].mxu0
    %1101 = vmatprep.mubr.f32.mxu0 0.0
    %1102 = vmatmul.mubr.f32.gmra.mrb[0].mxu0 %v74
    %v1103 = vpop.f32.mrb[0].mxu0
    %v1104 = vadd.f32 0.0, %v1103
    %v1105 = vpop.f32.mrb[0].mxu0
    %1106 = vmatprep.mubr.f32.mxu0 0.0
    %1107 = vmatmul.mubr.f32.gmra.mrb[0].mxu0 %v75
    %v1108 = vpop.f32.mrb[0].mxu0
    %v1109 = vadd.f32 0.0, %v1108
    %v1110 = vpop.f32.mrb[0].mxu0
    %1111 = vmatprep.mubr.f32.mxu0 0.0
    %1112 = vmatmul.mubr.f32.gmra.mrb[0].mxu0 %v76
    %v1113 = vpop.f32.mrb[0].mxu0
    %v1114 = vadd.f32 0.0, %v1113
    %v1115 = vpop.f32.mrb[0].mxu0
    %1116 = vmatprep.mubr.f32.mxu0 0.0
    %1117 = vmatmul.mubr.f32.gmra.mrb[0].mxu0 %v77
    %v1118 = vpop.f32.mrb[0].mxu0
    %v1119 = vadd.f32 0.0, %v1118
    %v1120 = vpop.f32.mrb[0].mxu0
    %1121 = vmatprep.mubr.f32.mxu0 0.0
    %1122 = vmatmul.mubr.f32.gmra.mrb[0].mxu0 %v78
    %v1123 = vpop.f32.mrb[0].mxu0
    %v1124 = vadd.f32 0.0, %v1123
    %v1125 = vpop.f32.mrb[0].mxu0
    %1126 = vmatprep.mubr.f32.mxu0 0.0
    %1127 = vmatmul.mubr.f32.gmra.mrb[0].mxu0 %v79
    %v1128 = vpop.f32.mrb[0].mxu0
    %v1129 = vadd.f32 0.0, %v1128
    %v1130 = vpop.f32.mrb[0].mxu0
    %1131 = vmatprep.mubr.f32.mxu0 0.0
    %1132 = vmatmul.mubr.f32.gmra.mrb[0].mxu0 %v80
    %v1133 = vpop.f32.mrb[0].mxu0
    %v1134 = vadd.f32 0.0, %v1133
    %v1135 = vpop.f32.mrb[0].mxu0
    %1136 = vmatprep.mubr.f32.mxu0 0.0
    %1137 = vmatmul.mubr.f32.gmra.mrb[0].mxu0 %v81
    %v1138 = vpop.f32.mrb[0].mxu0
    %v1139 = vadd.f32 0.0, %v1138
    %v1140 = vpop.f32.mrb[0].mxu0
    %1141 = vmatprep.mubr.f32.mxu0 0.0
    %1142 = vmatmul.mubr.f32.gmra.mrb[0].mxu0 %v82
    %v1143 = vpop.f32.mrb[0].mxu0
    %v1144 = vadd.f32 0.0, %v1143
    %v1145 = vpop.f32.mrb[0].mxu0
    %1146 = vmatprep.mubr.f32.mxu0 0.0
    %1147 = vmatmul.mubr.f32.gmra.mrb[0].mxu0 %v83
    %v1148 = vpop.f32.mrb[0].mxu0
    %v1149 = vadd.f32 0.0, %v1148
    %v1150 = vpop.f32.mrb[0].mxu0
    %1151 = vmatprep.mubr.f32.mxu0 0.0
    %1152 = vmatmul.mubr.f32.gmra.mrb[0].mxu0 %v84
    %v1153 = vpop.f32.mrb[0].mxu0
    %v1154 = vadd.f32 0.0, %v1153
    %v1155 = vpop.f32.mrb[0].mxu0
    %1156 = vmatprep.mubr.f32.mxu0 0.0
    %1157 = vmatmul.mubr.f32.gmra.mrb[0].mxu0 %v85
    %v1158 = vpop.f32.mrb[0].mxu0
    %v1159 = vadd.f32 0.0, %v1158
    %v1160 = vpop.f32.mrb[0].mxu0
    %1161 = vdwg.mxu0
    %1162 = vst.msk [vmem:[%s3] sm:$0xff] %vm103, %v1084
    %1163 = vst.msk [vmem:[%s3 + $0x8] sm:$0xff] %vm103, %v1089
    %1164 = vst.msk [vmem:[%s3 + $0x10] sm:$0xff] %vm103, %v1094
    %1165 = vst.msk [vmem:[%s3 + $0x18] sm:$0xff] %vm103, %v1099
    %1166 = vst.msk [vmem:[%s3 + $0x20] sm:$0xff] %vm103, %v1104
    %1167 = vst.msk [vmem:[%s3 + $0x28] sm:$0xff] %vm103, %v1109
    %1168 = vst.msk [vmem:[%s3 + $0x30] sm:$0xff] %vm103, %v1114
    %1169 = vst.msk [vmem:[%s3 + $0x38] sm:$0xff] %vm103, %v1119
    %1170 = vst.msk [vmem:[%s3 + $0x40] sm:$0xff] %vm103, %v1124
    %1171 = vst.msk [vmem:[%s3 + $0x48] sm:$0xff] %vm103, %v1129
    %1172 = vst.msk [vmem:[%s3 + $0x50] sm:$0xff] %vm103, %v1134
    %1173 = vst.msk [vmem:[%s3 + $0x58] sm:$0xff] %vm103, %v1139
    %1174 = vst.msk [vmem:[%s3 + $0x60] sm:$0xff] %vm103, %v1144
    %1175 = vst.msk [vmem:[%s3 + $0x68] sm:$0xff] %vm103, %v1149
    %1176 = vst.msk [vmem:[%s3 + $0x70] sm:$0xff] %vm103, %v1154
    %1177 = vst.msk [vmem:[%s3 + $0x78] sm:$0xff] %vm103, %v1159
    %v1178 = vstv %s86
    %v1179 = vadd.s32 %v1178, %v25
    %vm1180 = vcmp.lt.s32.totalorder %v1179, 128
    %v1181 = vsel %vm1180, %v891, 0.0
    %vm1182 = vcmask 1040384
    %v1183 = vsel %vm1182, %v1181, 0.0
    %1184 = vadd.xlane.f32.xlu0 %v1183
    %v1185 = vpop.xlane.xlu0 %1184
    %v1186 = vrot.slane %v1185, 4
    %v1187 = vadd.f32 %v1185, %v1186
    %v1188 = vrot.slane %v1187, 2
    %v1189 = vadd.f32 %v1187, %v1188
    %v1190 = vrot.slane %v1189, 1
    %v1191 = vadd.f32 %v1189, %v1190
    %s1192 = vtos %v1191
    %s1193 = sadd.f32 %s1192, 0.0
    %v1194 = vstv %s1193
    %1195 = vst [vmem:[#allocation4] sm:$0x1] %v1194
    // Predicated region
    $region14: #{tpu_custom_call.1} parent=1 // pred_check
      _
    $region15: #{tpu_custom_call.1} parent=1 // pred_check_branch
      %1197 = sbr.rel (0) target = $region17
    $region16: #{tpu_custom_call.1} parent=1 // pred_region
      _
    $region17: #{tpu_custom_call.1} parent=1 // pred_fallthru
      _
    // Predicated region
    $region18: #{tpu_custom_call.1} parent=1 // pred_check
      _
    $region19: #{tpu_custom_call.1} parent=1 // pred_check_branch
      %1199 = sbr.rel (0) target = $region21
    $region20: #{tpu_custom_call.1} parent=1 // pred_region
      %s1201 = ssub.s32 64, 64
      %1202 = vsyncadd [#allocation3], %s1201
      %s1204 = sshll.u32 [#allocation2], 4
      %s1205 = int_to_ptr.vmem [resolvable:$true] %s1204
      %1207 = dma.vmem_to_hbm [thread:$0]  %s1205, 64, %s4, [#allocation3]
    $region21: #{tpu_custom_call.1} parent=1 // pred_fallthru
      _
    // Predicated region
    $region22: #{tpu_custom_call.1} parent=1 // pred_check
      _
    $region23: #{tpu_custom_call.1} parent=1 // pred_check_branch
      %1209 = sbr.rel (0) target = $region25
    $region24: #{tpu_custom_call.1} parent=1 // pred_region
      %s1211 = ssub.s32 16, 16
      %1212 = vsyncadd [#allocation5], %s1211
      %s1214 = sshll.u32 [#allocation4], 4
      %s1215 = int_to_ptr.vmem [resolvable:$true] %s1214
      %1217 = dma.vmem_to_hbm [thread:$0]  %s1215, 16, %s5, [#allocation5]
    $region25: #{tpu_custom_call.1} parent=1 // pred_fallthru
      _
    // Predicated region
    $region26: #{tpu_custom_call.1} parent=1 // pred_check
      _
    $region27: #{tpu_custom_call.1} parent=1 // pred_check_branch
      %1219 = sbr.rel (0) target = $region29
    $region28: #{tpu_custom_call.1} parent=1 // pred_region
      _
    $region29: #{tpu_custom_call.1} parent=1 // pred_fallthru
      _
    // Predicated region
    $region30: #{tpu_custom_call.1} parent=1 // pred_check
      _
    $region31: #{tpu_custom_call.1} parent=1 // pred_check_branch
      %1221 = sbr.rel (0) target = $region33
    $region32: #{tpu_custom_call.1} parent=1 // pred_region
      %1222 = dma.done [#allocation3], 64
    $region33: #{tpu_custom_call.1} parent=1 // pred_fallthru
      _
    // Predicated region
    $region34: #{tpu_custom_call.1} parent=1 // pred_check
      _
    $region35: #{tpu_custom_call.1} parent=1 // pred_check_branch
      %1224 = sbr.rel (0) target = $region37
    $region36: #{tpu_custom_call.1} parent=1 // pred_region
      %1225 = dma.done [#allocation5], 16
    $region37: #{tpu_custom_call.1} parent=1 // pred_fallthru
      _
    %1226 = vsyncpa [#allocation3], 1
    %1227 = vsyncpa [#allocation5], 1

</llo_original>
